<compile_context>
chip_gen: v7x
topology: tpu7x:2x2x1
jax: 0.10.0
libtpu: 0.0.40
codegen_flags: <defaults>
</compile_context>

<pallas_src>
import numpy as np
import jax
import jax.numpy as jnp
from jax.experimental import pallas as pl
from jax.experimental.pallas import tpu as pltpu

NUM_JOINTS = 24
NUM_BETAS = 10
NUM_POSE_FEATS = 207  # 23 joints * 9 rotation entries
NUM_BLEND_FEATS = NUM_BETAS + NUM_POSE_FEATS  # 217

# Standard SMPL kinematic tree (kintree_table[0]); parents[0] is unused.
SMPL_PARENTS = np.array(
    [-1, 0, 0, 0, 1, 2, 3, 4, 5, 6, 7, 8, 9, 9, 9, 12, 13, 14, 16, 17, 18,
     19, 20, 21], dtype=np.int32)


def _round_up(x, m):
    return ((x + m - 1) // m) * m


def _tiling(V, max_tile=1024):
    # Vertex tile (lanes): multiple of 128, capped so the double-buffered
    # blend-table tile stays well inside every generation's scoped VMEM.
    v128 = _round_up(V, 128)
    tv = min(max_tile, v128)
    return tv, _round_up(V, tv)


# ----------------------------------------------------------------------------
# Fused Pallas kernel: shape+pose blend + LBS skinning, per V-tile.
# ----------------------------------------------------------------------------
def _smpl_fused_kernel(feat_ref, a_ref, bd_ref, vt_ref, wt_ref,
                       vposed_ref, verts_ref):
    # feat (B, 217) f32  : [beta | pose_feature]
    # a    (12B, 24) f32 : packed rel. transforms, row (c*4+j)*B + b
    # bd   (217, 3*TV) bf16 : [shapedirs ; posedirs] tile-packed
    # vt   (1, 3*TV) f32 | wt (24, TV) f32
    # outputs: vposed (B, 3*TV) f32, verts (B, 3*TV) f32
    # Column layout of the 3*TV axis: [x(0..TV) | y(0..TV) | z(0..TV)].
    B = feat_ref.shape[0]
    tv = wt_ref.shape[1]

    # Single blend matmul: batch on the MXU M dim, K = 217, bf16 -> f32 acc.
    feat = feat_ref[...].astype(bd_ref.dtype)
    v_posed = jnp.dot(feat, bd_ref[...],
                      preferred_element_type=jnp.float32) + vt_ref[...]
    vposed_ref[...] = v_posed                                    # (B, 3*TV)

    # LBS: per-vertex skinning rows  t[(c*4+j)*B + b, v] = T[b, v, c, j]
    #      (A was pre-packed host-side so this is one M=12B matmul).
    t = jnp.dot(a_ref[...], wt_ref[...],
                preferred_element_type=jnp.float32)              # (12B, TV)
    vpx = v_posed[:, 0 * tv:1 * tv]
    vpy = v_posed[:, 1 * tv:2 * tv]
    vpz = v_posed[:, 2 * tv:3 * tv]
    for c in range(3):
        base = 4 * B * c
        r = (t[base + 3 * B:base + 4 * B, :]
             + t[base + 0 * B:base + 1 * B, :] * vpx
             + t[base + 1 * B:base + 2 * B, :] * vpy
             + t[base + 2 * B:base + 3 * B, :] * vpz)
        verts_ref[:, c * tv:(c + 1) * tv] = r


# ----------------------------------------------------------------------------
# Plain-JAX glue (tiny per-joint math — not vertex-scaled)
# ----------------------------------------------------------------------------
def batch_rodrigues(rot_vecs):
    # rot_vecs: (N, 3) axis-angle -> (N, 3, 3) rotation matrices.
    angle = jnp.sqrt(jnp.sum(jnp.square(rot_vecs + 1e-8), axis=1, keepdims=True))
    rot_dir = rot_vecs / angle
    cos = jnp.cos(angle)[:, :, None]
    sin = jnp.sin(angle)[:, :, None]
    rx, ry, rz = rot_dir[:, 0], rot_dir[:, 1], rot_dir[:, 2]
    zeros = jnp.zeros_like(rx)
    K = jnp.stack([zeros, -rz, ry, rz, zeros, -rx, -ry, rx, zeros],
                  axis=1).reshape(-1, 3, 3)
    ident = jnp.eye(3, dtype=rot_vecs.dtype)[None]
    return ident + sin * K + (1.0 - cos) * jnp.matmul(K, K)


def batch_rigid_transform(rot_mats, joints, parents):
    # rot_mats (B, 24, 3, 3), joints (B, 24, 3) -> posed joints, A (B,24,4,4)
    B, N = joints.shape[:2]
    dtype = joints.dtype
    rel_joints = jnp.concatenate(
        [joints[:, :1], joints[:, 1:] - joints[:, parents[1:]]], axis=1)
    top = jnp.concatenate([rot_mats, rel_joints[..., None]], axis=-1)   # (B,N,3,4)
    bottom = jnp.broadcast_to(
        jnp.array([0., 0., 0., 1.], dtype=dtype), (B, N, 1, 4))
    transforms_mat = jnp.concatenate([top, bottom], axis=-2)            # (B,N,4,4)
    chain = [transforms_mat[:, 0]]
    for i in range(1, N):
        chain.append(jnp.matmul(chain[int(parents[i])], transforms_mat[:, i]))
    transforms = jnp.stack(chain, axis=1)                               # (B,N,4,4)
    posed_joints = transforms[:, :, :3, 3]
    joints_homogen = jnp.concatenate(
        [joints, jnp.zeros((B, N, 1), dtype=dtype)], axis=2)[..., None]
    rel_transforms = transforms - jnp.pad(
        jnp.matmul(transforms, joints_homogen),
        ((0, 0), (0, 0), (0, 0), (3, 0)))
    return posed_joints, rel_transforms


def _unpack_tiled(x_flat, V, V_pad, TV):
    # (B, 3*V_pad) tile-packed -> (B, V, 3) PyTorch layout (single pass).
    B = x_flat.shape[0]
    nV = V_pad // TV
    x = x_flat.reshape(B, nV, 3, TV)
    x = jnp.transpose(x, (0, 1, 3, 2)).reshape(B, V_pad, 3)
    return x[:, :V, :]


# ----------------------------------------------------------------------------
# Forward pass
# ----------------------------------------------------------------------------
def smpl_forward(params, beta, theta, theta_in_rodrigues=True):
    f32 = jnp.float32
    beta = beta.astype(f32)
    theta = theta.astype(f32)
    B = beta.shape[0]
    V = params['v_template'].shape[0]
    TV = params['tile_v']
    V_pad = params['v_pad']
    nV = V_pad // TV

    # Joints directly from beta (J_regressor folded into J_dirs offline).
    delta_J = jnp.dot(beta, params['J_dirs']).reshape(B, NUM_JOINTS, 3)
    J = params['J_template'][None] + delta_J

    if theta_in_rodrigues:
        Rs = batch_rodrigues(theta.reshape(-1, 3)).reshape(B, NUM_JOINTS, 3, 3)
    else:
        Rs = theta.reshape(B, NUM_JOINTS, 3, 3)
    pose_feature = (Rs[:, 1:] - jnp.eye(3, dtype=f32)).reshape(B, NUM_POSE_FEATS)

    _J_transformed, A = batch_rigid_transform(Rs, J, params['parents'])

    # Pack the blend features: one (B, 217) matrix for a single fused matmul.
    feat = jnp.concatenate([beta, pose_feature], axis=1)       # (B, 217)

    # Pack A for the skinning matmul: row (c*4 + j)*B + b, col k  <-  A[b, k, c, j]
    A_pack = jnp.transpose(A, (2, 3, 0, 1))[:3].reshape(12 * B, NUM_JOINTS)

    vposed_flat, verts_flat = pl.pallas_call(
        _smpl_fused_kernel,
        grid=(nV,),
        in_specs=[
            pl.BlockSpec((B, NUM_BLEND_FEATS), lambda i: (0, 0)),
            pl.BlockSpec((12 * B, NUM_JOINTS), lambda i: (0, 0)),
            pl.BlockSpec((NUM_BLEND_FEATS, 3 * TV), lambda i: (0, i)),
            pl.BlockSpec((1, 3 * TV), lambda i: (0, i)),
            pl.BlockSpec((NUM_JOINTS, TV), lambda i: (0, i)),
        ],
        out_specs=[
            pl.BlockSpec((B, 3 * TV), lambda i: (0, i)),
            pl.BlockSpec((B, 3 * TV), lambda i: (0, i)),
        ],
        out_shape=[
            jax.ShapeDtypeStruct((B, 3 * V_pad), f32),
            jax.ShapeDtypeStruct((B, 3 * V_pad), f32),
        ],
        compiler_params=pltpu.CompilerParams(
            dimension_semantics=("parallel",)),
    )(feat, A_pack, params['bd_pack'], params['vt_pack'], params['wt_pack'])

    v_posed = _unpack_tiled(vposed_flat, V, V_pad, TV)
    verts = _unpack_tiled(verts_flat, V, V_pad, TV)

    W = jnp.broadcast_to(params['weights'][None], (B, V, NUM_JOINTS))
    # A[:, 0] is an invertible rigid transform, so pinverse == inverse.
    inverse_global_trans = jnp.linalg.inv(A[:, 0])
    return v_posed, verts, delta_J, A, W, inverse_global_trans


# ----------------------------------------------------------------------------
# Pure-JAX reference (mirrors the PyTorch forward literally) for sanity check
# ----------------------------------------------------------------------------
def smpl_forward_reference(params, beta, theta):
    B = beta.shape[0]
    V = params['v_template'].shape[0]
    v_shaped = jnp.matmul(beta, params['shapedirs_flat']).reshape(B, V, 3) \
        + params['v_template']
    J = jnp.einsum('bvk,vj->bjk', v_shaped, params['J_regressor'])
    delta_J = J - params['J_template'][None]
    Rs = batch_rodrigues(theta.reshape(-1, 3)).reshape(B, NUM_JOINTS, 3, 3)
    pose_feature = (Rs[:, 1:] - jnp.eye(3, dtype=beta.dtype)).reshape(
        B, NUM_POSE_FEATS)
    v_posed = jnp.matmul(pose_feature, params['posedirs_flat']).reshape(
        B, V, 3) + v_shaped
    _, A = batch_rigid_transform(Rs, J, params['parents'])
    W = jnp.broadcast_to(params['weights'][None], (B, V, NUM_JOINTS))
    T = jnp.matmul(W, A.reshape(B, NUM_JOINTS, 16)).reshape(B, V, 4, 4)
    homo = jnp.concatenate(
        [v_posed, jnp.ones((B, V, 1), dtype=beta.dtype)], axis=2)
    verts = jnp.matmul(T, homo[..., None])[:, :, :3, 0]
    inv_g = jnp.linalg.inv(A[:, 0])
    return v_posed, verts, delta_J, A, W, inv_g


# ----------------------------------------------------------------------------
# Deterministic synthetic "SMPL model" parameters (no .pkl loading)
# ----------------------------------------------------------------------------
def _pack_dirs(dirs, TV, V_pad, dtype):
    # dirs: (V, 3, K) -> (K, 3*V_pad) tile-packed [tile | coord | vertex].
    V, _, K = dirs.shape
    nV = V_pad // TV
    d = jnp.transpose(dirs, (2, 1, 0))                       # (K, 3, V)
    d = jnp.pad(d, ((0, 0), (0, 0), (0, V_pad - V)))
    d = d.reshape(K, 3, nV, TV)
    d = jnp.transpose(d, (0, 2, 1, 3))                       # (K, nV, 3, TV)
    return d.reshape(K, 3 * V_pad).astype(dtype)


def _pack_template(v_template, TV, V_pad):
    V = v_template.shape[0]
    nV = V_pad // TV
    t = jnp.pad(v_template.T, ((0, 0), (0, V_pad - V)))      # (3, V_pad)
    t = t.reshape(3, nV, TV)
    t = jnp.transpose(t, (1, 0, 2))                          # (nV, 3, TV)
    return t.reshape(1, 3 * V_pad)


def make_params(key, V=256, dirs_dtype=jnp.bfloat16):
    ks = jax.random.split(key, 5)
    f32 = jnp.float32
    v_template = jax.random.normal(ks[0], (V, 3), f32) * 0.5
    shapedirs = jax.random.normal(ks[1], (V, 3, NUM_BETAS), f32) * 0.03
    posedirs = jax.random.normal(ks[2], (V, 3, NUM_POSE_FEATS), f32) * 0.01
    # J_regressor buffer layout matches the module: (V, 24), columns sum to 1.
    J_regressor = jax.nn.softmax(
        jax.random.normal(ks[3], (V, NUM_JOINTS), f32) * 2.0, axis=0)
    weights = jax.nn.softmax(
        jax.random.normal(ks[4], (V, NUM_JOINTS), f32) * 2.0, axis=1)
    J_template = J_regressor.T @ v_template                  # (24, 3)
    # Fold J_regressor into a tiny (10, 72) matrix applied to beta in glue:
    # delta_J[b,j,c] = sum_s beta[b,s] * sum_v Jreg[v,j]*shapedirs[v,c,s]
    J_dirs = jnp.einsum('vk,vcs->skc', J_regressor, shapedirs).reshape(
        NUM_BETAS, NUM_JOINTS * 3)

    TV, V_pad = _tiling(V)
    wt_pack = jnp.pad(weights.T, ((0, 0), (0, V_pad - V)))   # (24, V_pad)

    # Single blend table: [shapedirs ; posedirs] -> (217, 3*V_pad) bf16.
    sd_pack = _pack_dirs(shapedirs, TV, V_pad, dirs_dtype)
    pd_pack = _pack_dirs(posedirs, TV, V_pad, dirs_dtype)
    bd_pack = jnp.concatenate([sd_pack, pd_pack], axis=0)

    return dict(
        # raw buffers (returned outputs / reference path)
        v_template=v_template,
        J_template=J_template,
        J_regressor=J_regressor,
        weights=weights,
        parents=SMPL_PARENTS,
        shapedirs_flat=jnp.reshape(shapedirs, (V * 3, NUM_BETAS)).T,     # (10, 3V)
        posedirs_flat=jnp.reshape(posedirs, (V * 3, NUM_POSE_FEATS)).T,  # (207, 3V)
        # kernel-side packed buffers
        J_dirs=J_dirs,
        bd_pack=bd_pack,
        vt_pack=_pack_template(v_template, TV, V_pad),
        wt_pack=wt_pack,
        tile_v=TV,
        v_pad=V_pad,
    )


if __name__ == "__main__":
    key = jax.random.PRNGKey(0)
    kp, kb, kt = jax.random.split(key, 3)
    B, V = 2, 256
    params = make_params(kp, V=V)
    beta = jax.random.normal(kb, (B, NUM_BETAS), jnp.float32) * 0.5
    theta = jax.random.normal(kt, (B, NUM_JOINTS * 3), jnp.float32) * 0.2

    fwd = jax.jit(lambda b, t: smpl_forward(params, b, t))
    outs = jax.block_until_ready(fwd(beta, theta))

    ref = jax.block_until_ready(
        jax.jit(lambda b, t: smpl_forward_reference(params, b, t))(beta, theta))

    names = ["v_posed", "verts", "delta_J", "A", "W", "inverse_global_trans"]
    for name, a, b in zip(names, outs, ref):
        a_np, b_np = np.asarray(a), np.asarray(b)
        assert a_np.shape == b_np.shape, (name, a_np.shape, b_np.shape)
        if not np.allclose(a_np, b_np, atol=3e-2, rtol=3e-2):
            raise AssertionError(
                f"mismatch in {name}: max abs diff "
                f"{np.max(np.abs(a_np - b_np))}")
    print("KERNEL_OK")
</pallas_src>

<mosaic_0001>
module attributes {stable_mosaic.version = 11 : i64} {
  func.func @_smpl_fused_kernel(%arg0: i32, %arg1: memref<2x217xf32, #tpu.memory_space<vmem>>, %arg2: memref<24x24xf32, #tpu.memory_space<vmem>>, %arg3: memref<217x768xbf16, #tpu.memory_space<vmem>>, %arg4: memref<1x768xf32, #tpu.memory_space<vmem>>, %arg5: memref<24x256xf32, #tpu.memory_space<vmem>>, %arg6: memref<2x768xf32, #tpu.memory_space<vmem>>, %arg7: memref<2x768xf32, #tpu.memory_space<vmem>>) attributes {dimension_semantics = [#tpu.dimension_semantics<parallel>], iteration_bounds = array<i64: 1>, scalar_prefetch = 0 : i64, scratch_operands = 0 : i64, tpu.core_type = #tpu.core_type<tc>, window_params = [{pipeline_mode = #tpu.pipeline_mode<synchronous>, transform_indices = @transform_0, window_bounds = array<i64: 2, 217>}, {pipeline_mode = #tpu.pipeline_mode<synchronous>, transform_indices = @transform_1, window_bounds = array<i64: 24, 24>}, {transform_indices = @transform_2, window_bounds = array<i64: 217, 768>}, {transform_indices = @transform_3, window_bounds = array<i64: 1, 768>}, {transform_indices = @transform_4, window_bounds = array<i64: 24, 256>}, {transform_indices = @transform_5, window_bounds = array<i64: 2, 768>}, {transform_indices = @transform_6, window_bounds = array<i64: 2, 768>}]} {
    %c0 = arith.constant 0 : index
    %c0_0 = arith.constant 0 : index
    %0 = vector.load %arg1[%c0, %c0_0] : memref<2x217xf32, #tpu.memory_space<vmem>>, vector<2x217xf32>
    %1 = arith.truncf %0 : vector<2x217xf32> to vector<2x217xbf16>
    %c0_1 = arith.constant 0 : index
    %c0_2 = arith.constant 0 : index
    %2 = vector.load %arg3[%c0_1, %c0_2] : memref<217x768xbf16, #tpu.memory_space<vmem>>, vector<217x768xbf16>
    %cst = arith.constant dense<0.000000e+00> : vector<2x768xf32>
    %3 = tpu.matmul %1, %2, %cst {dimension_numbers = #tpu.dot_dimension_numbers<[1], [0], [0], [1], [0, 0, 1, 1], [], []>} : vector<2x217xbf16>, vector<217x768xbf16>, vector<2x768xf32> -> vector<2x768xf32>
    %c0_3 = arith.constant 0 : index
    %c0_4 = arith.constant 0 : index
    %4 = vector.load %arg4[%c0_3, %c0_4] : memref<1x768xf32, #tpu.memory_space<vmem>>, vector<1x768xf32>
    %5 = vector.broadcast %4 : vector<1x768xf32> to vector<2x768xf32>
    %6 = arith.addf %3, %5 : vector<2x768xf32>
    %c0_5 = arith.constant 0 : index
    %c0_6 = arith.constant 0 : index
    %7 = vector.load %arg6[%c0_5, %c0_6] : memref<2x768xf32, #tpu.memory_space<vmem>>, vector<2x768xf32>
    tpu.vector_store %arg6[%c0_5, %c0_6], %6 {strides = array<i32>} : memref<2x768xf32, #tpu.memory_space<vmem>>, vector<2x768xf32>,
    %c0_7 = arith.constant 0 : index
    %c0_8 = arith.constant 0 : index
    %8 = vector.load %arg2[%c0_7, %c0_8] : memref<24x24xf32, #tpu.memory_space<vmem>>, vector<24x24xf32>
    %c0_9 = arith.constant 0 : index
    %c0_10 = arith.constant 0 : index
    %9 = vector.load %arg5[%c0_9, %c0_10] : memref<24x256xf32, #tpu.memory_space<vmem>>, vector<24x256xf32>
    %cst_11 = arith.constant dense<0.000000e+00> : vector<24x256xf32>
    %10 = tpu.matmul %8, %9, %cst_11 {dimension_numbers = #tpu.dot_dimension_numbers<[1], [0], [0], [1], [0, 0, 1, 1], [], []>} : vector<24x24xf32>, vector<24x256xf32>, vector<24x256xf32> -> vector<24x256xf32>
    %11 = vector.extract_strided_slice %6 {offsets = [0, 0], sizes = [2, 256], strides = [1, 1]} : vector<2x768xf32> to vector<2x256xf32>
    %12 = vector.extract_strided_slice %6 {offsets = [0, 256], sizes = [2, 256], strides = [1, 1]} : vector<2x768xf32> to vector<2x256xf32>
    %13 = vector.extract_strided_slice %6 {offsets = [0, 512], sizes = [2, 256], strides = [1, 1]} : vector<2x768xf32> to vector<2x256xf32>
    %14 = vector.extract_strided_slice %10 {offsets = [6, 0], sizes = [2, 256], strides = [1, 1]} : vector<24x256xf32> to vector<2x256xf32>
    %15 = vector.extract_strided_slice %10 {offsets = [0, 0], sizes = [2, 256], strides = [1, 1]} : vector<24x256xf32> to vector<2x256xf32>
    %16 = arith.mulf %15, %11 : vector<2x256xf32>
    %17 = arith.addf %14, %16 : vector<2x256xf32>
    %18 = vector.extract_strided_slice %10 {offsets = [2, 0], sizes = [2, 256], strides = [1, 1]} : vector<24x256xf32> to vector<2x256xf32>
    %19 = arith.mulf %18, %12 : vector<2x256xf32>
    %20 = arith.addf %17, %19 : vector<2x256xf32>
    %21 = vector.extract_strided_slice %10 {offsets = [4, 0], sizes = [2, 256], strides = [1, 1]} : vector<24x256xf32> to vector<2x256xf32>
    %22 = arith.mulf %21, %13 : vector<2x256xf32>
    %23 = arith.addf %20, %22 : vector<2x256xf32>
    %c0_12 = arith.constant 0 : index
    %c0_13 = arith.constant 0 : index
    %24 = vector.load %arg7[%c0_12, %c0_13] : memref<2x768xf32, #tpu.memory_space<vmem>>, vector<2x256xf32>
    tpu.vector_store %arg7[%c0_12, %c0_13], %23 {strides = array<i32>} : memref<2x768xf32, #tpu.memory_space<vmem>>, vector<2x256xf32>,
    %25 = vector.extract_strided_slice %10 {offsets = [14, 0], sizes = [2, 256], strides = [1, 1]} : vector<24x256xf32> to vector<2x256xf32>
    %26 = vector.extract_strided_slice %10 {offsets = [8, 0], sizes = [2, 256], strides = [1, 1]} : vector<24x256xf32> to vector<2x256xf32>
    %27 = arith.mulf %26, %11 : vector<2x256xf32>
    %28 = arith.addf %25, %27 : vector<2x256xf32>
    %29 = vector.extract_strided_slice %10 {offsets = [10, 0], sizes = [2, 256], strides = [1, 1]} : vector<24x256xf32> to vector<2x256xf32>
    %30 = arith.mulf %29, %12 : vector<2x256xf32>
    %31 = arith.addf %28, %30 : vector<2x256xf32>
    %32 = vector.extract_strided_slice %10 {offsets = [12, 0], sizes = [2, 256], strides = [1, 1]} : vector<24x256xf32> to vector<2x256xf32>
    %33 = arith.mulf %32, %13 : vector<2x256xf32>
    %34 = arith.addf %31, %33 : vector<2x256xf32>
    %c0_14 = arith.constant 0 : index
    %c256 = arith.constant 256 : index
    %35 = vector.load %arg7[%c0_14, %c256] : memref<2x768xf32, #tpu.memory_space<vmem>>, vector<2x256xf32>
    tpu.vector_store %arg7[%c0_14, %c256], %34 {strides = array<i32>} : memref<2x768xf32, #tpu.memory_space<vmem>>, vector<2x256xf32>,
    %36 = vector.extract_strided_slice %10 {offsets = [22, 0], sizes = [2, 256], strides = [1, 1]} : vector<24x256xf32> to vector<2x256xf32>
    %37 = vector.extract_strided_slice %10 {offsets = [16, 0], sizes = [2, 256], strides = [1, 1]} : vector<24x256xf32> to vector<2x256xf32>
    %38 = arith.mulf %37, %11 : vector<2x256xf32>
    %39 = arith.addf %36, %38 : vector<2x256xf32>
    %40 = vector.extract_strided_slice %10 {offsets = [18, 0], sizes = [2, 256], strides = [1, 1]} : vector<24x256xf32> to vector<2x256xf32>
    %41 = arith.mulf %40, %12 : vector<2x256xf32>
    %42 = arith.addf %39, %41 : vector<2x256xf32>
    %43 = vector.extract_strided_slice %10 {offsets = [20, 0], sizes = [2, 256], strides = [1, 1]} : vector<24x256xf32> to vector<2x256xf32>
    %44 = arith.mulf %43, %13 : vector<2x256xf32>
    %45 = arith.addf %42, %44 : vector<2x256xf32>
    %c0_15 = arith.constant 0 : index
    %c512 = arith.constant 512 : index
    %46 = vector.load %arg7[%c0_15, %c512] : memref<2x768xf32, #tpu.memory_space<vmem>>, vector<2x256xf32>
    tpu.vector_store %arg7[%c0_15, %c512], %45 {strides = array<i32>} : memref<2x768xf32, #tpu.memory_space<vmem>>, vector<2x256xf32>,
    return
  }
  func.func @transform_0(%arg0: i32) -> (i32, i32) {
    %c0_i32 = arith.constant 0 : i32
    %c0_i32_0 = arith.constant 0 : i32
    %c0_i32_1 = arith.constant 0 : i32
    return %c0_i32, %c0_i32_0 : i32, i32
  }
  func.func @transform_1(%arg0: i32) -> (i32, i32) {
    %c0_i32 = arith.constant 0 : i32
    %c0_i32_0 = arith.constant 0 : i32
    %c0_i32_1 = arith.constant 0 : i32
    return %c0_i32, %c0_i32_0 : i32, i32
  }
  func.func @transform_2(%arg0: i32) -> (i32, i32) {
    %c0_i32 = arith.constant 0 : i32
    %c0_i32_0 = arith.constant 0 : i32
    return %c0_i32, %arg0 : i32, i32
  }
  func.func @transform_3(%arg0: i32) -> (i32, i32) {
    %c0_i32 = arith.constant 0 : i32
    %c0_i32_0 = arith.constant 0 : i32
    return %c0_i32, %arg0 : i32, i32
  }
  func.func @transform_4(%arg0: i32) -> (i32, i32) {
    %c0_i32 = arith.constant 0 : i32
    %c0_i32_0 = arith.constant 0 : i32
    return %c0_i32, %arg0 : i32, i32
  }
  func.func @transform_5(%arg0: i32) -> (i32, i32) {
    %c0_i32 = arith.constant 0 : i32
    %c0_i32_0 = arith.constant 0 : i32
    return %c0_i32, %arg0 : i32, i32
  }
  func.func @transform_6(%arg0: i32) -> (i32, i32) {
    %c0_i32 = arith.constant 0 : i32
    %c0_i32_0 = arith.constant 0 : i32
    return %c0_i32, %arg0 : i32, i32
  }
}

</mosaic_0001>

<llo_original>
// kernel: custom-call.11
$region0: #{custom-call.11}
  %s0 = inlined_call_operand.vmem [shape: f32[2,4,4], index: 0, kind: input, shape index: {}]
  %s1 = inlined_call_operand.vmem [shape: f32[2,4,4], index: 1, kind: output, shape index: {0}]
  %s2 = inlined_call_operand.hbm [shape: s32[2,4], index: 2, kind: output, shape index: {1}]
  %s3 = inlined_call_operand.vmem [shape: s32[2,4], index: 3, kind: output, shape index: {2}]
  %4 = xla_tuple %s1, %s2, %s3
  $region1: #{custom-call.11} parent=0
    #allocation0 [shape = 'u8[4096]{0}', space=vmem, size = 0x1000, scoped, tag = 'operand span for operand 0']
    #allocation1 [shape = 'u8[4096]{0}', space=vmem, size = 0x1000, scoped, tag = 'packed  for operand 0']
    #allocation2 [shape = 'u8[4096]{0}', space=vmem, size = 0x1000, scoped, tag = 'operand span for operand 1']
    #allocation3 [shape = 'u8[4096]{0}', space=vmem, size = 0x1000, scoped, tag = 'packed  for operand 1']
    #allocation4 [shape = 'u8[4096]{0}', space=vmem, size = 0x1000, scoped, tag = 'operand span for operand 2']
    #allocation5 [shape = 'u8[2048]{0}', space=vmem, size = 0x800, scoped, tag = 'packed  for operand 2']
    #allocation6 [shape = 's32[2]{0}', space=sflag, size = 0x8, scoped, tag = 'scoped memory for custom-call.11']
    #allocation7 [shape = 'u8[4096]{0}', space=vmem, size = 0x1000, scoped, tag = 'operand span for operand 3']
    #allocation8 [shape = 'u8[2048]{0}', space=vmem, size = 0x800, scoped, tag = 'packed  for operand 3']
    %5 = vsyncpa [#allocation6], 0
    %s6 = scalar_lea.sflag [#allocation6], 1
    %7 = vsyncpa %s6, 0
    loop: start=0, step=1, limit=4
    $region2: #{custom-call.11} parent=1 // loop_pre_header
      _
    $region3: #{custom-call.11} parent=1 // loop_header
      %s9 = sphi 0, %s13
      %p10 = scmp.ge.s32.totalorder %s9, 4
      %s21 = sphi 0, %s23
      %s24 = sphi 0, %s21
      %s25 = sphi 0, %s24
      %s41 = sphi 0, %s25
      %s49 = sphi 0, %s51
      %s52 = sphi 0, %s49
      %s53 = sphi 0, %s52
      %s69 = sphi 0, %s53
    $region4: #{custom-call.11} parent=1 // loop_header_branch
      %12 = sbr.rel (%p10) target = $region8
    $region5: #{custom-call.11} parent=1 // loop_body
      %s14 = ssub.s32 %s9, 1
      %s15 = ssub.s32 %s9, 2
      %s16 = sadd.s32 %s9, 1
      %s17 = sshrl.u32 %s9, 3
      %s18 = sshrl.u32 %s16, 3
      %s19 = ssub.s32 %s17, %s18
      %p20 = scmp.eq.s32.totalorder %s19, 0
      %s22 = sadd.s32 %s21, 1
      %s23 = scalar_select %p20, %s21, %s22
      %p26 = pneg %p20
      %p27 = scmp.eq.s32.totalorder %s9, 1
      %p28 = por %p26, %p27
      %p29 = scmp.ne.s32.totalorder %s21, %s24
      %p30 = scmp.eq.s32.totalorder %s9, 0
      %p31 = por %p29, %p30
      %p32 = scmp.ne.s32.totalorder %s21, %s24
      %p33 = scmp.eq.s32.totalorder %s14, 1
      %p34 = por %p32, %p33
      %p35 = scmp.ne.s32.totalorder %s24, %s25
      %p36 = scmp.eq.s32.totalorder %s14, 0
      %p37 = por %p35, %p36
      %p38 = scmp.ne.s32.totalorder %s24, %s25
      %p39 = scmp.eq.s32.totalorder %s15, 1
      %p40 = por %p38, %p39
      %p42 = scmp.ne.s32.totalorder %s25, %s41
      %p43 = scmp.eq.s32.totalorder %s15, 0
      %p44 = por %p42, %p43
      %s45 = sshrl.u32 %s9, 3
      %s46 = sshrl.u32 %s16, 3
      %s47 = ssub.s32 %s45, %s46
      %p48 = scmp.eq.s32.totalorder %s47, 0
      %s50 = sadd.s32 %s49, 1
      %s51 = scalar_select %p48, %s49, %s50
      %p54 = pneg %p48
      %p55 = scmp.eq.s32.totalorder %s9, 1
      %p56 = por %p54, %p55
      %p57 = scmp.ne.s32.totalorder %s49, %s52
      %p58 = scmp.eq.s32.totalorder %s9, 0
      %p59 = por %p57, %p58
      %p60 = scmp.ne.s32.totalorder %s49, %s52
      %p61 = scmp.eq.s32.totalorder %s14, 1
      %p62 = por %p60, %p61
      %p63 = scmp.ne.s32.totalorder %s52, %s53
      %p64 = scmp.eq.s32.totalorder %s14, 0
      %p65 = por %p63, %p64
      %p66 = scmp.ne.s32.totalorder %s52, %s53
      %p67 = scmp.eq.s32.totalorder %s15, 1
      %p68 = por %p66, %p67
      %p70 = scmp.ne.s32.totalorder %s53, %s69
      %p71 = scmp.eq.s32.totalorder %s15, 0
      %p72 = por %p70, %p71
      %p73 = scmp.le.s32.totalorder 1, %s9
      %p74 = scmp.lt.s32.totalorder %s9, 3
      %p75 = pnand %p73, %p74
      %p76 = pneg %p75
      // Predicated region
      $region9: #{custom-call.11} parent=5 // pred_check
        _
      $region10: #{custom-call.11} parent=5 // pred_check_branch
        %78 = sbr.rel (%p75) target = $region12
      $region11: #{custom-call.11} parent=5 // pred_region
        %s79 = ssub.s32 %s9, 1
      $region12: #{custom-call.11} parent=5 // pred_fallthru
        _
      %p80 = scmp.lt.s32.totalorder %s9, 2
      // Predicated region
      $region13: #{custom-call.11} parent=5 // pred_check
        %p81 = pneg %p80
      $region14: #{custom-call.11} parent=5 // pred_check_branch
        %83 = sbr.rel (%p81) target = $region16
      $region15: #{custom-call.11} parent=5 // pred_region
        %s84 = sand.u32 %s9, 1
        %s85 = sand.u32 %s9, 1
        %s86 = smul.addr %s85, 4
        %s87 = scalar_lea.vmem [#allocation1], %s86
        %s88 = smul.addr %s9, 4
        %s89 = scalar_lea.vmem %s0, %s88
        // Predicated region
        $region17: #{custom-call.11} parent=15 // pred_check
          _
        $region18: #{custom-call.11} parent=15 // pred_check_branch
          %91 = sbr.rel (0) target = $region20
        $region19: #{custom-call.11} parent=15 // pred_region
          // Predicated region
          $region21: #{custom-call.11} parent=19 // pred_check
            _
          $region22: #{custom-call.11} parent=19 // pred_check_branch
            %93 = sbr.rel target = $region24
          $region23: #{custom-call.11} parent=19 // pred_region
            // Predicated region
            $region36: #{custom-call.11} parent=23 // pred_check
              _
            $region37: #{custom-call.11} parent=23 // pred_check_branch
              %108 = sbr.rel (0) target = $region39
            $region38: #{custom-call.11} parent=23 // pred_region
              loop: start=0, step=1, limit=1
              $region40: #{custom-call.11} parent=38 // loop_pre_header
                _
              $region41: #{custom-call.11} parent=38 // loop_header
                %s111 = sphi 0, %s115
                %p112 = scmp.ge.s32.totalorder %s111, 1
                %s116 = sphi %s89, %s89
                %s117 = sphi %s87, %s87
              $region42: #{custom-call.11} parent=38 // loop_header_branch
                %114 = sbr.rel (%p112) target = $region46
              $region43: #{custom-call.11} parent=38 // loop_body
                %v118 = vld [vmem:[%s116] sm:$0xf]
                %119 = vst [vmem:[%s117] sm:$0xf] %v118
              $region44: #{custom-call.11} parent=38 // loop_footer
                %s115 = sadd.s32 1, %s111
              $region45: #{custom-call.11} parent=38 // loop_footer_branch
                %110 = sbr.rel target = $region41
              $region46: #{custom-call.11} parent=38 // loop_exit
                _
            $region39: #{custom-call.11} parent=23 // pred_fallthru
              _
          $region24: #{custom-call.11} parent=19 // pred_fallthru
            _
          // Predicated region
          $region25: #{custom-call.11} parent=19 // pred_check
            _
          $region26: #{custom-call.11} parent=19 // pred_check_branch
            %95 = sbr.rel (0) target = $region28
          $region27: #{custom-call.11} parent=19 // pred_region
            loop: start=0, step=1, limit=1
            $region29: #{custom-call.11} parent=27 // loop_pre_header
              _
            $region30: #{custom-call.11} parent=27 // loop_header
              %s98 = sphi 0, %s102
              %p99 = scmp.ge.s32.totalorder %s98, 1
              %s103 = sphi %s89, %s89
              %s104 = sphi %s87, %s87
            $region31: #{custom-call.11} parent=27 // loop_header_branch
              %101 = sbr.rel (%p99) target = $region35
            $region32: #{custom-call.11} parent=27 // loop_body
              %v105 = vld [vmem:[%s103] sm:$0xf]
              %106 = vst [vmem:[%s104] sm:$0xf] %v105
            $region33: #{custom-call.11} parent=27 // loop_footer
              %s102 = sadd.s32 1, %s98
            $region34: #{custom-call.11} parent=27 // loop_footer_branch
              %97 = sbr.rel target = $region30
            $region35: #{custom-call.11} parent=27 // loop_exit
              _
          $region28: #{custom-call.11} parent=19 // pred_fallthru
            _
        $region20: #{custom-call.11} parent=15 // pred_fallthru
          _
        %120 = vnop
      $region16: #{custom-call.11} parent=5 // pred_fallthru
        _
      %p121 = scmp.le.s32.totalorder 1, %s9
      %p122 = scmp.lt.s32.totalorder %s9, 3
      %p123 = pnand %p121, %p122
      %p124 = pneg %p123
      // Predicated region
      $region47: #{custom-call.11} parent=5 // pred_check
        _
      $region48: #{custom-call.11} parent=5 // pred_check_branch
        %126 = sbr.rel (%p123) target = $region50
      $region49: #{custom-call.11} parent=5 // pred_region
        #allocation9 [shape = 's32[4,128]{1,0}', space=vmem, size = 0x1000, scoped, tag = 'scratch for permutations']
        %s127 = ssub.s32 %s9, 1
        %s128 = sand.u32 %s14, 1
        %s129 = sand.u32 %s14, 1
        %s130 = smul.addr %s129, 4
        %s131 = scalar_lea.vmem [#allocation1], %s130
        %s132 = sand.u32 %s14, 1
        %s133 = sand.u32 %s14, 1
        %s134 = smul.addr %s133, 4
        %s135 = scalar_lea.vmem [#allocation1], %s134
        %s136 = sand.u32 %s14, 1
        %s137 = sand.u32 %s14, 1
        %s138 = smul.addr %s137, 4
        %s139 = scalar_lea.vmem [#allocation3], %s138
        %p140 = pneg %p37
        %p141 = pneg %p34
        %s142 = sand.u32 %s24, 1
        %s143 = scalar_lea.sflag [#allocation6], %s142
        %s144 = sand.u32 %s24, 1
        %s145 = smul.addr %s144, 2
        %s146 = scalar_lea.vmem [#allocation5], %s145
        %p147 = pneg %p65
        %p148 = pneg %p62
        %s149 = sand.u32 %s52, 1
        %s150 = sand.u32 %s52, 1
        %s151 = smul.addr %s150, 2
        %s152 = scalar_lea.vmem [#allocation8], %s151
        %s154 = sshllo.u32 0, 4
        %v155 = vld [vmem:[%s135] sm:%s154]
        %156 = vst [vmem:[#allocation0] sm:%s154] %v155
        %s157 = sshrl.u32 %s14, 3
        %s158 = sshrl.u32 %s14, 3
        %v159 = vld [vmem:[#allocation0] sm:$0xff]
        %160 = vst [vmem:[#allocation2] sm:$0xff] %v159
        %s161 = sand.u32 %s14, 7
        %s162 = scalar_lea.vmem [#allocation4], %s161
        %s163 = sand.u32 %s14, 7
        %s164 = scalar_lea.vmem [#allocation7], %s163
        %165 = vst [vmem:[%s162] sm:$0x1] 0
        %v166 = vlaneseq
        %v167 = vshrl.u32 %v166, 7
        %v168 = vmov %v167
        %170 = vst [vmem:[#allocation9] sm:$0xff] %v168
        loop: start=0, step=1, limit=4
        $region52: #{custom-call.11} parent=49 // loop_pre_header
          _
        $region53: #{custom-call.11} parent=49 // loop_header
          %s172 = sphi 0, %s176
          %p173 = scmp.ge.s32.totalorder %s172, 4
        $region54: #{custom-call.11} parent=49 // loop_header_branch
          %175 = sbr.rel (%p173) target = $region58
        $region55: #{custom-call.11} parent=49 // loop_body
          %v177 = vstv %s172
          %v178 = vlaneseq
          %v179 = vshrl.u32 %v178, 7
          %v180 = vmov %v179
          %v181 = vld [vmem:[#allocation2] sm:$0xff]
          %v182 = vand.u32 2147483647, %v181
          %v184 = vstv %s172
          %vm185 = vcmp.ge.s32.totalorder %v180, %v184
          %vm186 = vcmp.lt.s32.totalorder %v180, 4
          %vm187 = vmand %vm185, %vm186
          %vm188 = vcmp.lt.f32.partialorder -inf, %v182
          %vm189 = vmand %vm187, %vm188
          %v190 = vsel %vm189, %v180, %v177
          %v191 = vsel %vm189, %v182, -inf
          %v192 = vrot.slane %v191, 1
          %v193 = vrot.slane %v190, 1
          %vm194 = vcmp.ge.f32.partialorder %v192, %v191
          %v195 = vsel %vm194, %v192, %v191
          %v196 = vsel %vm194, %v193, %v190
          %v197 = vrot.slane %v192, 1
          %v198 = vrot.slane %v193, 1
          %vm199 = vcmp.ge.f32.partialorder %v197, %v195
          %v200 = vsel %vm199, %v197, %v195
          %v201 = vsel %vm199, %v198, %v196
          %v202 = vrot.slane %v197, 1
          %v203 = vrot.slane %v198, 1
          %vm204 = vcmp.ge.f32.partialorder %v202, %v200
          %v205 = vsel %vm204, %v202, %v200
          %v206 = vsel %vm204, %v203, %v201
          %v207 = vrot.slane %v202, 1
          %v208 = vrot.slane %v203, 1
          %vm209 = vcmp.ge.f32.partialorder %v207, %v205
          %v210 = vsel %vm209, %v207, %v205
          %v211 = vsel %vm209, %v208, %v206
          %v212 = vrot.slane %v207, 1
          %v213 = vrot.slane %v208, 1
          %vm214 = vcmp.ge.f32.partialorder %v212, %v210
          %v215 = vsel %vm214, %v212, %v210
          %v216 = vsel %vm214, %v213, %v211
          %v217 = vrot.slane %v212, 1
          %v218 = vrot.slane %v213, 1
          %vm219 = vcmp.ge.f32.partialorder %v217, %v215
          %v220 = vsel %vm219, %v217, %v215
          %v221 = vsel %vm219, %v218, %v216
          %v222 = vrot.slane %v217, 1
          %v223 = vrot.slane %v218, 1
          %vm224 = vcmp.ge.f32.partialorder %v222, %v220
          %v225 = vsel %vm224, %v222, %v220
          %v226 = vsel %vm224, %v223, %v221
          %s227 = ssub.s32 128, %s172
          %228 = vrot.lane.b32.xlu0 %v226, %s227
          %v229 = vpop.permute.xlu0 %228
          %s230 = vtos %v229
          %v231 = vstv %s172
          %v232 = vlaneseq
          %v233 = vand.u32 %v232, 127
          %vm234 = vcmp.eq.s32.totalorder %v233, %v231
          %v235 = vstv %s230
          %v236 = vld [vmem:[%s162] ss:$0 sm:$0xff]
          %v237 = vsel %vm234, %v235, %v236
          %238 = vst [vmem:[%s162] sm:$0x1] %v237
          %s239 = scalar_lea.vmem [#allocation2], %s172
          %s240 = scalar_lea.vmem [#allocation2], %s230
          %v241 = vld [vmem:[%s239] ss:$0 sm:$0xff]
          %v242 = vld [vmem:[%s240] ss:$0 sm:$0xff]
          %243 = vst [vmem:[%s240] sm:$0x1] %v241
          %244 = vst [vmem:[%s239] sm:$0x1] %v242
          %s245 = scalar_lea.vmem [#allocation9], %s172
          %s246 = scalar_lea.vmem [#allocation9], %s230
          %v247 = vld [vmem:[%s245] ss:$0 sm:$0xff]
          %v248 = vld [vmem:[%s246] ss:$0 sm:$0xff]
          %249 = vst [vmem:[%s246] sm:$0x1] %v247
          %250 = vst [vmem:[%s245] sm:$0x1] %v248
          %vm251 = vcmp.ne.f32.partialorder %v242, 0.0
          %vm252 = vmand %vm234, %vm251
          %v253 = vsel %vm252, %v242, 1.0
          %v254 = vlaneseq
          %v255 = vand.u32 %v254, 127
          %v256 = vstv %s172
          %vm257 = vcmp.gt.s32.totalorder %v255, %v256
          %v258 = vsel %vm257, %v242, 0.0
          %v259 = vlaneseq
          %v260 = vshrl.u32 %v259, 7
          %v261 = vmov %v260
          %v262 = vld [vmem:[#allocation2] sm:$0xff]
          %v264 = vstv %s172
          %vm265 = vcmp.gt.s32.totalorder %v261, %v264
          %v266 = vsel %vm265, %v253, 1.0
          %v267 = vrcp.pop %v266
          %v268 = vmul.f32 %v262, %v267
          %vm269 = vmand %vm265, %vm234
          %v270 = vsel %vm269, %v268, 0.0
          %271 = vadd.xlane.f32.xlu0 %v270
          %v272 = vpop.xlane.xlu0 %271
          %v273 = vmul.f32 %v272, %v258
          %v274 = vsub.f32 %v268, %v273
          %275 = vst [vmem:[#allocation2] sm:$0xff] %v274
        $region56: #{custom-call.11} parent=49 // loop_footer
          %s176 = sadd.s32 1, %s172
        $region57: #{custom-call.11} parent=49 // loop_footer_branch
          %171 = sbr.rel target = $region53
        $region58: #{custom-call.11} parent=49 // loop_exit
          _
        %v276 = vld [vmem:[#allocation9] sm:$0xff]
        %s277 = scalar_lea.vmem [#allocation9], 8
        %s278 = scalar_lea.vmem [#allocation9], 16
        %s279 = scalar_lea.vmem [#allocation9], 24
        %s280 = scalar_lea.vmem [#allocation9], 32
        %s281 = scalar_lea.vmem [#allocation9], 40
        %s282 = scalar_lea.vmem [#allocation9], 48
        %s283 = scalar_lea.vmem [#allocation9], 56
        %s284 = scalar_lea.vmem [#allocation9], 64
        %s285 = scalar_lea.vmem [#allocation9], 72
        %s286 = scalar_lea.vmem [#allocation9], 80
        %s287 = scalar_lea.vmem [#allocation9], 88
        %s288 = scalar_lea.vmem [#allocation9], 96
        %s289 = scalar_lea.vmem [#allocation9], 104
        %s290 = scalar_lea.vmem [#allocation9], 112
        %s291 = scalar_lea.vmem [#allocation9], 120
        %292 = vxpose.xlu0.b32.start [1/16] %v276, 128
        %293 = vxpose.xlu0.b32.cont [2/16] 0, 128
        %294 = vxpose.xlu0.b32.cont [3/16] 0, 128
        %295 = vxpose.xlu0.b32.cont [4/16] 0, 128
        %296 = vxpose.xlu0.b32.cont [5/16] 0, 128
        %297 = vxpose.xlu0.b32.cont [6/16] 0, 128
        %298 = vxpose.xlu0.b32.cont [7/16] 0, 128
        %299 = vxpose.xlu0.b32.cont [8/16] 0, 128
        %300 = vxpose.xlu0.b32.cont [9/16] 0, 128
        %301 = vxpose.xlu0.b32.cont [10/16] 0, 128
        %302 = vxpose.xlu0.b32.cont [11/16] 0, 128
        %303 = vxpose.xlu0.b32.cont [12/16] 0, 128
        %304 = vxpose.xlu0.b32.cont [13/16] 0, 128
        %305 = vxpose.xlu0.b32.cont [14/16] 0, 128
        %306 = vxpose.xlu0.b32.cont [15/16] 0, 128
        %307 = vxpose.xlu0.b32.end [16/16] 0, 128
        %v308 = vpop.trf.xlu0
        %v309 = vpop.trf.xlu0
        %v310 = vpop.trf.xlu0
        %v311 = vpop.trf.xlu0
        %v312 = vpop.trf.xlu0
        %v313 = vpop.trf.xlu0
        %v314 = vpop.trf.xlu0
        %v315 = vpop.trf.xlu0
        %v316 = vpop.trf.xlu0
        %v317 = vpop.trf.xlu0
        %v318 = vpop.trf.xlu0
        %v319 = vpop.trf.xlu0
        %v320 = vpop.trf.xlu0
        %v321 = vpop.trf.xlu0
        %v322 = vpop.trf.xlu0
        %v323 = vpop.trf.xlu0
        %324 = vst [vmem:[%s164] sm:$0x1] %v308
        %s326 = sshllo.u32 0, 4
        %v328 = vld [vmem:[#allocation2] sm:%s326]
        %s329 = sshllo.u32 0, 4
        %330 = vst [vmem:[%s139] sm:%s329] %v328
        %s332 = sshllo.u32 0, 2
        %v334 = vld [vmem:[#allocation4] sm:%s332]
        %s335 = sshllo.u32 0, 2
        %336 = vst [vmem:[%s146] sm:%s335] %v334
        %s338 = sshllo.u32 0, 2
        %v340 = vld [vmem:[#allocation7] sm:%s338]
        %s341 = sshllo.u32 0, 2
        %342 = vst [vmem:[%s152] sm:%s341] %v340
        %s343 = sand.u32 %s14, 1
        %s344 = sand.u32 %s14, 1
        %s345 = smul.addr %s344, 4
        %s346 = scalar_lea.vmem [#allocation3], %s345
        %s347 = sand.u32 %s24, 1
        %s348 = scalar_lea.sflag [#allocation6], %s347
        %s349 = sand.u32 %s24, 1
        %s350 = smul.addr %s349, 2
        %s351 = scalar_lea.vmem [#allocation5], %s350
        %s352 = sand.u32 %s52, 1
        %s353 = sand.u32 %s52, 1
        %s354 = smul.addr %s353, 2
        %s355 = scalar_lea.vmem [#allocation8], %s354
        %s356 = smul.addr %s14, 4
        %s357 = scalar_lea.vmem %s1, %s356
        // Predicated region
        $region59: #{custom-call.11} parent=49 // pred_check
          _
        $region60: #{custom-call.11} parent=49 // pred_check_branch
          %359 = sbr.rel (0) target = $region62
        $region61: #{custom-call.11} parent=49 // pred_region
          // Predicated region
          $region63: #{custom-call.11} parent=61 // pred_check
            _
          $region64: #{custom-call.11} parent=61 // pred_check_branch
            %361 = sbr.rel target = $region66
          $region65: #{custom-call.11} parent=61 // pred_region
            // Predicated region
            $region78: #{custom-call.11} parent=65 // pred_check
              _
            $region79: #{custom-call.11} parent=65 // pred_check_branch
              %376 = sbr.rel (0) target = $region81
            $region80: #{custom-call.11} parent=65 // pred_region
              loop: start=0, step=1, limit=1
              $region82: #{custom-call.11} parent=80 // loop_pre_header
                _
              $region83: #{custom-call.11} parent=80 // loop_header
                %s379 = sphi 0, %s383
                %p380 = scmp.ge.s32.totalorder %s379, 1
                %s384 = sphi %s346, %s346
                %s385 = sphi %s357, %s357
              $region84: #{custom-call.11} parent=80 // loop_header_branch
                %382 = sbr.rel (%p380) target = $region88
              $region85: #{custom-call.11} parent=80 // loop_body
                %v386 = vld [vmem:[%s384] sm:$0xf]
                %387 = vst [vmem:[%s385] sm:$0xf] %v386
              $region86: #{custom-call.11} parent=80 // loop_footer
                %s383 = sadd.s32 1, %s379
              $region87: #{custom-call.11} parent=80 // loop_footer_branch
                %378 = sbr.rel target = $region83
              $region88: #{custom-call.11} parent=80 // loop_exit
                _
            $region81: #{custom-call.11} parent=65 // pred_fallthru
              _
          $region66: #{custom-call.11} parent=61 // pred_fallthru
            _
          // Predicated region
          $region67: #{custom-call.11} parent=61 // pred_check
            _
          $region68: #{custom-call.11} parent=61 // pred_check_branch
            %363 = sbr.rel (0) target = $region70
          $region69: #{custom-call.11} parent=61 // pred_region
            loop: start=0, step=1, limit=1
            $region71: #{custom-call.11} parent=69 // loop_pre_header
              _
            $region72: #{custom-call.11} parent=69 // loop_header
              %s366 = sphi 0, %s370
              %p367 = scmp.ge.s32.totalorder %s366, 1
              %s371 = sphi %s346, %s346
              %s372 = sphi %s357, %s357
            $region73: #{custom-call.11} parent=69 // loop_header_branch
              %369 = sbr.rel (%p367) target = $region77
            $region74: #{custom-call.11} parent=69 // loop_body
              %v373 = vld [vmem:[%s371] sm:$0xf]
              %374 = vst [vmem:[%s372] sm:$0xf] %v373
            $region75: #{custom-call.11} parent=69 // loop_footer
              %s370 = sadd.s32 1, %s366
            $region76: #{custom-call.11} parent=69 // loop_footer_branch
              %365 = sbr.rel target = $region72
            $region77: #{custom-call.11} parent=69 // loop_exit
              _
          $region70: #{custom-call.11} parent=61 // pred_fallthru
            _
        $region62: #{custom-call.11} parent=49 // pred_fallthru
          _
        %388 = vnop
        // Predicated region
        $region89: #{custom-call.11} parent=49 // pred_check
          %p389 = pneg %p34
        $region90: #{custom-call.11} parent=49 // pred_check_branch
          %391 = sbr.rel (%p389) target = $region92
        $region91: #{custom-call.11} parent=49 // pred_region
          %s392 = sshrl.u32 %s14, 3
          %s394 = ssub.s32 32, 32
          %395 = vsyncadd %s348, %s394
          %s396 = smul.addr %s392, 32
          %s397 = scalar_lea.hbm %s2, %s396
          %s399 = sshll.u32 %s351, 4
          %s400 = int_to_ptr.vmem [resolvable:$true] %s399
          %402 = dma.vmem_to_hbm [thread:$0]  %s400, 32, %s397, %s348
        $region92: #{custom-call.11} parent=49 // pred_fallthru
          _
        // Predicated region
        $region93: #{custom-call.11} parent=49 // pred_check
          %p403 = pneg %p62
        $region94: #{custom-call.11} parent=49 // pred_check_branch
          %405 = sbr.rel (%p403) target = $region96
        $region95: #{custom-call.11} parent=49 // pred_region
          %s406 = sshrl.u32 %s14, 3
          %s407 = smul.addr %s406, 2
          %s408 = scalar_lea.vmem %s3, %s407
          // Predicated region
          $region97: #{custom-call.11} parent=95 // pred_check
            _
          $region98: #{custom-call.11} parent=95 // pred_check_branch
            %410 = sbr.rel (0) target = $region100
          $region99: #{custom-call.11} parent=95 // pred_region
            // Predicated region
            $region101: #{custom-call.11} parent=99 // pred_check
              _
            $region102: #{custom-call.11} parent=99 // pred_check_branch
              %412 = sbr.rel target = $region104
            $region103: #{custom-call.11} parent=99 // pred_region
              // Predicated region
              $region116: #{custom-call.11} parent=103 // pred_check
                _
              $region117: #{custom-call.11} parent=103 // pred_check_branch
                %427 = sbr.rel (0) target = $region119
              $region118: #{custom-call.11} parent=103 // pred_region
                loop: start=0, step=1, limit=1
                $region120: #{custom-call.11} parent=118 // loop_pre_header
                  _
                $region121: #{custom-call.11} parent=118 // loop_header
                  %s430 = sphi 0, %s434
                  %p431 = scmp.ge.s32.totalorder %s430, 1
                  %s435 = sphi %s355, %s355
                  %s436 = sphi %s408, %s408
                $region122: #{custom-call.11} parent=118 // loop_header_branch
                  %433 = sbr.rel (%p431) target = $region126
                $region123: #{custom-call.11} parent=118 // loop_body
                  %v437 = vld [vmem:[%s435] sm:$0x3]
                  %438 = vst [vmem:[%s436] sm:$0x3] %v437
                $region124: #{custom-call.11} parent=118 // loop_footer
                  %s434 = sadd.s32 1, %s430
                $region125: #{custom-call.11} parent=118 // loop_footer_branch
                  %429 = sbr.rel target = $region121
                $region126: #{custom-call.11} parent=118 // loop_exit
                  _
              $region119: #{custom-call.11} parent=103 // pred_fallthru
                _
            $region104: #{custom-call.11} parent=99 // pred_fallthru
              _
            // Predicated region
            $region105: #{custom-call.11} parent=99 // pred_check
              _
            $region106: #{custom-call.11} parent=99 // pred_check_branch
              %414 = sbr.rel (0) target = $region108
            $region107: #{custom-call.11} parent=99 // pred_region
              loop: start=0, step=1, limit=1
              $region109: #{custom-call.11} parent=107 // loop_pre_header
                _
              $region110: #{custom-call.11} parent=107 // loop_header
                %s417 = sphi 0, %s421
                %p418 = scmp.ge.s32.totalorder %s417, 1
                %s422 = sphi %s355, %s355
                %s423 = sphi %s408, %s408
              $region111: #{custom-call.11} parent=107 // loop_header_branch
                %420 = sbr.rel (%p418) target = $region115
              $region112: #{custom-call.11} parent=107 // loop_body
                %v424 = vld [vmem:[%s422] sm:$0x3]
                %425 = vst [vmem:[%s423] sm:$0x3] %v424
              $region113: #{custom-call.11} parent=107 // loop_footer
                %s421 = sadd.s32 1, %s417
              $region114: #{custom-call.11} parent=107 // loop_footer_branch
                %416 = sbr.rel target = $region110
              $region115: #{custom-call.11} parent=107 // loop_exit
                _
            $region108: #{custom-call.11} parent=99 // pred_fallthru
              _
          $region100: #{custom-call.11} parent=95 // pred_fallthru
            _
          %439 = vnop
        $region96: #{custom-call.11} parent=49 // pred_fallthru
          _
      $region50: #{custom-call.11} parent=5 // pred_fallthru
        _
      %p440 = scmp.le.s32.totalorder 2, %s9
      // Predicated region
      $region127: #{custom-call.11} parent=5 // pred_check
        %p441 = pneg %p440
      $region128: #{custom-call.11} parent=5 // pred_check_branch
        %443 = sbr.rel (%p441) target = $region130
      $region129: #{custom-call.11} parent=5 // pred_region
        %s444 = ssub.s32 %s9, 2
        %s445 = sand.u32 %s15, 1
        %s446 = sand.u32 %s15, 1
        %s447 = smul.addr %s446, 4
        %s448 = scalar_lea.vmem [#allocation3], %s447
        // Predicated region
        $region131: #{custom-call.11} parent=129 // pred_check
          %p449 = pneg %p40
        $region132: #{custom-call.11} parent=129 // pred_check_branch
          %451 = sbr.rel (%p449) target = $region134
        $region133: #{custom-call.11} parent=129 // pred_region
          %s452 = sand.u32 %s25, 1
          %s453 = scalar_lea.sflag [#allocation6], %s452
          %s454 = sand.u32 %s25, 1
          %s455 = smul.addr %s454, 2
          %s456 = scalar_lea.vmem [#allocation5], %s455
          %457 = dma.done %s453, 32
        $region134: #{custom-call.11} parent=129 // pred_fallthru
          _
        // Predicated region
        $region135: #{custom-call.11} parent=129 // pred_check
          %p458 = pneg %p68
        $region136: #{custom-call.11} parent=129 // pred_check_branch
          %460 = sbr.rel (%p458) target = $region138
        $region137: #{custom-call.11} parent=129 // pred_region
          %s461 = sand.u32 %s53, 1
          %s462 = sand.u32 %s53, 1
          %s463 = smul.addr %s462, 2
          %s464 = scalar_lea.vmem [#allocation8], %s463
        $region138: #{custom-call.11} parent=129 // pred_fallthru
          _
      $region130: #{custom-call.11} parent=5 // pred_fallthru
        _
    $region6: #{custom-call.11} parent=1 // loop_footer
      %s13 = sadd.s32 1, %s9
    $region7: #{custom-call.11} parent=1 // loop_footer_branch
      %8 = sbr.rel target = $region3
    $region8: #{custom-call.11} parent=1 // loop_exit
      _
    %465 = vsyncpa [#allocation6], 1
    %s466 = scalar_lea.sflag [#allocation6], 1
    %467 = vsyncpa %s466, 1

// kernel: custom-call.13
$region0: #{custom-call.13}
  %s0 = inlined_call_operand.vmem [shape: f32[2,1,4,4], index: 0, kind: input, shape index: {}]
  %s1 = inlined_call_operand.vmem [shape: f32[2,1,4,4], index: 1, kind: output, shape index: {}]
  $region1: #{custom-call.13} parent=0
    #allocation0 [shape = 'u8[4096]{0}', space=vmem, size = 0x1000, scoped, tag = 'operand span for operand 0']
    #allocation1 [shape = 'u8[4096]{0}', space=vmem, size = 0x1000, scoped, tag = 'packed  for operand 0']
    #allocation2 [shape = 'u8[4096]{0}', space=vmem, size = 0x1000, scoped, tag = 'operand span for operand 1']
    #allocation3 [shape = 'u8[4096]{0}', space=vmem, size = 0x1000, scoped, tag = 'packed  for operand 1']
    loop: start=0, step=1, limit=4
    $region2: #{custom-call.13} parent=1 // loop_pre_header
      _
    $region3: #{custom-call.13} parent=1 // loop_header
      %s3 = sphi 0, %s7
      %p4 = scmp.ge.s32.totalorder %s3, 4
      %s10 = sphi 0, %s36
      %s11 = sphi 0, %s32
      %s12 = sphi 0, %s28
      %s13 = sphi 0, %s24
      %s14 = sphi 0, %s10
      %s15 = sphi 0, %s11
      %s16 = sphi 0, %s12
      %s17 = sphi 0, %s13
      %s18 = sphi 0, %s14
      %s19 = sphi 0, %s15
      %s20 = sphi 0, %s16
      %s21 = sphi 0, %s17
    $region4: #{custom-call.13} parent=1 // loop_header_branch
      %6 = sbr.rel (%p4) target = $region8
    $region5: #{custom-call.13} parent=1 // loop_body
      %s8 = ssub.s32 %s3, 1
      %s9 = ssub.s32 %s3, 2
      %s22 = sadd.s32 1, %s13
      %p23 = scmp.ge.s32.totalorder %s22, 1
      %s24 = scalar_select %p23, 0, %s22
      %s25 = sadd.s32 1, %s12
      %s26 = scalar_select %p23, %s25, %s12
      %p27 = scmp.ge.s32.totalorder %s26, 1
      %s28 = scalar_select %p27, 0, %s26
      %s29 = sadd.s32 1, %s11
      %s30 = scalar_select %p27, %s29, %s11
      %p31 = scmp.ge.s32.totalorder %s30, 1
      %s32 = scalar_select %p31, 0, %s30
      %s33 = sadd.s32 1, %s10
      %s34 = scalar_select %p31, %s33, %s10
      %p35 = scmp.ge.s32.totalorder %s34, 2
      %s36 = scalar_select %p35, 0, %s34
      %p37 = scmp.le.s32.totalorder 1, %s3
      %p38 = scmp.lt.s32.totalorder %s3, 3
      %p39 = pnand %p37, %p38
      %p40 = pneg %p39
      // Predicated region
      $region9: #{custom-call.13} parent=5 // pred_check
        _
      $region10: #{custom-call.13} parent=5 // pred_check_branch
        %42 = sbr.rel (%p39) target = $region12
      $region11: #{custom-call.13} parent=5 // pred_region
        %s43 = ssub.s32 %s3, 1
      $region12: #{custom-call.13} parent=5 // pred_fallthru
        _
      %p44 = scmp.lt.s32.totalorder %s3, 2
      // Predicated region
      $region13: #{custom-call.13} parent=5 // pred_check
        %p45 = pneg %p44
      $region14: #{custom-call.13} parent=5 // pred_check_branch
        %47 = sbr.rel (%p45) target = $region16
      $region15: #{custom-call.13} parent=5 // pred_region
        %s48 = sand.u32 %s3, 1
        %s49 = sand.u32 %s3, 1
        %s50 = smul.addr %s49, 4
        %s51 = scalar_lea.vmem [#allocation1], %s50
        %s52 = sadd.s32 %s13, %s12
        %s53 = sadd.s32 %s52, %s11
        %s54 = sadd.s32 %s53, %s10
        %s55 = smul.addr %s54, 4
        %s56 = scalar_lea.vmem %s0, %s55
        // Predicated region
        $region17: #{custom-call.13} parent=15 // pred_check
          _
        $region18: #{custom-call.13} parent=15 // pred_check_branch
          %58 = sbr.rel (0) target = $region20
        $region19: #{custom-call.13} parent=15 // pred_region
          // Predicated region
          $region21: #{custom-call.13} parent=19 // pred_check
            _
          $region22: #{custom-call.13} parent=19 // pred_check_branch
            %60 = sbr.rel target = $region24
          $region23: #{custom-call.13} parent=19 // pred_region
            // Predicated region
            $region36: #{custom-call.13} parent=23 // pred_check
              _
            $region37: #{custom-call.13} parent=23 // pred_check_branch
              %75 = sbr.rel (0) target = $region39
            $region38: #{custom-call.13} parent=23 // pred_region
              loop: start=0, step=1, limit=1
              $region40: #{custom-call.13} parent=38 // loop_pre_header
                _
              $region41: #{custom-call.13} parent=38 // loop_header
                %s78 = sphi 0, %s82
                %p79 = scmp.ge.s32.totalorder %s78, 1
                %s83 = sphi %s56, %s56
                %s84 = sphi %s51, %s51
              $region42: #{custom-call.13} parent=38 // loop_header_branch
                %81 = sbr.rel (%p79) target = $region46
              $region43: #{custom-call.13} parent=38 // loop_body
                %v85 = vld [vmem:[%s83] sm:$0xf]
                %86 = vst [vmem:[%s84] sm:$0xf] %v85
              $region44: #{custom-call.13} parent=38 // loop_footer
                %s82 = sadd.s32 1, %s78
              $region45: #{custom-call.13} parent=38 // loop_footer_branch
                %77 = sbr.rel target = $region41
              $region46: #{custom-call.13} parent=38 // loop_exit
                _
            $region39: #{custom-call.13} parent=23 // pred_fallthru
              _
          $region24: #{custom-call.13} parent=19 // pred_fallthru
            _
          // Predicated region
          $region25: #{custom-call.13} parent=19 // pred_check
            _
          $region26: #{custom-call.13} parent=19 // pred_check_branch
            %62 = sbr.rel (0) target = $region28
          $region27: #{custom-call.13} parent=19 // pred_region
            loop: start=0, step=1, limit=1
            $region29: #{custom-call.13} parent=27 // loop_pre_header
              _
            $region30: #{custom-call.13} parent=27 // loop_header
              %s65 = sphi 0, %s69
              %p66 = scmp.ge.s32.totalorder %s65, 1
              %s70 = sphi %s56, %s56
              %s71 = sphi %s51, %s51
            $region31: #{custom-call.13} parent=27 // loop_header_branch
              %68 = sbr.rel (%p66) target = $region35
            $region32: #{custom-call.13} parent=27 // loop_body
              %v72 = vld [vmem:[%s70] sm:$0xf]
              %73 = vst [vmem:[%s71] sm:$0xf] %v72
            $region33: #{custom-call.13} parent=27 // loop_footer
              %s69 = sadd.s32 1, %s65
            $region34: #{custom-call.13} parent=27 // loop_footer_branch
              %64 = sbr.rel target = $region30
            $region35: #{custom-call.13} parent=27 // loop_exit
              _
          $region28: #{custom-call.13} parent=19 // pred_fallthru
            _
        $region20: #{custom-call.13} parent=15 // pred_fallthru
          _
        %87 = vnop
      $region16: #{custom-call.13} parent=5 // pred_fallthru
        _
      %p88 = scmp.le.s32.totalorder 1, %s3
      %p89 = scmp.lt.s32.totalorder %s3, 3
      %p90 = pnand %p88, %p89
      %p91 = pneg %p90
      // Predicated region
      $region47: #{custom-call.13} parent=5 // pred_check
        _
      $region48: #{custom-call.13} parent=5 // pred_check_branch
        %93 = sbr.rel (%p90) target = $region50
      $region49: #{custom-call.13} parent=5 // pred_region
        #allocation4 [shape = 'f32[4,4]{1,0}', space=vmem, size = 0x1000, scoped, tag = 'rescaled input a']
        %s94 = ssub.s32 %s3, 1
        %s95 = sand.u32 %s8, 1
        %s96 = sand.u32 %s8, 1
        %s97 = smul.addr %s96, 4
        %s98 = scalar_lea.vmem [#allocation1], %s97
        %s99 = sand.u32 %s8, 1
        %s100 = sand.u32 %s8, 1
        %s101 = smul.addr %s100, 4
        %s102 = scalar_lea.vmem [#allocation1], %s101
        %s103 = sand.u32 %s8, 1
        %s104 = sand.u32 %s8, 1
        %s105 = smul.addr %s104, 4
        %s106 = scalar_lea.vmem [#allocation3], %s105
        %s108 = sshllo.u32 0, 4
        %v109 = vld [vmem:[%s102] sm:%s108]
        %110 = vst [vmem:[#allocation0] sm:%s108] %v109
        %v111 = vlaneseq
        %v112 = vand.u32 %v111, 127
        %vm113 = vcmp.lt.s32.totalorder %v112, 4
        %v114 = vlaneseq
        %v115 = vshrl.u32 %v114, 7
        %vm117 = vcmp.eq.s32.totalorder %v115, %v112
        %v118 = vld [vmem:[#allocation0] sm:$0xff]
        %v119 = vsel %vm117, %v118, 0.0
        %120 = vadd.xlane.f32.xlu0 %v119
        %v121 = vpop.xlane.xlu0 %120
        %vm122 = vcmp.ge.s32.totalorder %v115, %v112
        %vm123 = vmand %vm122, %vm113
        %v124 = vsel %vm123, %v118, 0.0
        %v125 = vrcp.pop %v121
        %v126 = vmul.f32 %v124, %v125
        %127 = vst [vmem:[#allocation4] sm:$0xff] %v126
        %v128 = vlaneseq
        %v129 = vand.u32 %v128, 127
        %v130 = vlaneseq
        %v131 = vshrl.u32 %v130, 7
        %vm133 = vcmp.eq.s32.totalorder %v129, %v131
        %v134 = vlaneseq
        %v135 = vand.u32 %v134, 127
        %vm136 = vcmp.eq.s32.totalorder %v135, 0
        %v137 = vsel %vm136, 1.0, -1.0
        %v138 = vsel %vm133, %v137, 0.0
        %s139 = scalar_lea.vmem [#allocation4], 1
        %v140 = vld [vmem:[%s139] ss:$0 sm:$0xff]
        %v141 = vxor.u32 %v140, 2147483648
        %v142 = vlaneseq
        %v143 = vand.u32 %v142, 127
        %vm144 = vcmp.eq.s32.totalorder %v143, 1
        %v145 = vmul.f32 %v141, %v138
        %146 = vadd.xlane.f32.xlu0 %v145
        %v147 = vpop.xlane.xlu0 %146
        %v148 = vsel %vm144, %v147, %v138
        %s149 = scalar_lea.vmem [#allocation4], 2
        %v150 = vld [vmem:[%s149] ss:$0 sm:$0xff]
        %v151 = vxor.u32 %v150, 2147483648
        %v152 = vlaneseq
        %v153 = vand.u32 %v152, 127
        %vm154 = vcmp.eq.s32.totalorder %v153, 2
        %v155 = vmul.f32 %v151, %v148
        %156 = vadd.xlane.f32.xlu0 %v155
        %v157 = vpop.xlane.xlu0 %156
        %v158 = vsel %vm154, %v157, %v148
        %s159 = scalar_lea.vmem [#allocation4], 3
        %v160 = vld [vmem:[%s159] ss:$0 sm:$0xff]
        %v161 = vxor.u32 %v160, 2147483648
        %v162 = vlaneseq
        %v163 = vand.u32 %v162, 127
        %vm164 = vcmp.eq.s32.totalorder %v163, 3
        %v165 = vmul.f32 %v161, %v158
        %166 = vadd.xlane.f32.xlu0 %v165
        %v167 = vpop.xlane.xlu0 %166
        %v168 = vsel %vm164, %v167, %v158
        %v169 = vrcp.pop %v121
        %v170 = vmul.f32 %v168, %v169
        %vm171 = vweird.f32 %v121
        %v172 = vsel %vm171, %v168, %v170
        %173 = vst [vmem:[#allocation2] sm:$0xff] %v172
        %s175 = sshllo.u32 0, 4
        %v177 = vld [vmem:[#allocation2] sm:%s175]
        %s178 = sshllo.u32 0, 4
        %179 = vst [vmem:[%s106] sm:%s178] %v177
        %s180 = sand.u32 %s8, 1
        %s181 = sand.u32 %s8, 1
        %s182 = smul.addr %s181, 4
        %s183 = scalar_lea.vmem [#allocation3], %s182
        %s184 = sadd.s32 %s17, %s16
        %s185 = sadd.s32 %s184, %s15
        %s186 = sadd.s32 %s185, %s14
        %s187 = smul.addr %s186, 4
        %s188 = scalar_lea.vmem %s1, %s187
        // Predicated region
        $region51: #{custom-call.13} parent=49 // pred_check
          _
        $region52: #{custom-call.13} parent=49 // pred_check_branch
          %190 = sbr.rel (0) target = $region54
        $region53: #{custom-call.13} parent=49 // pred_region
          // Predicated region
          $region55: #{custom-call.13} parent=53 // pred_check
            _
          $region56: #{custom-call.13} parent=53 // pred_check_branch
            %192 = sbr.rel target = $region58
          $region57: #{custom-call.13} parent=53 // pred_region
            // Predicated region
            $region70: #{custom-call.13} parent=57 // pred_check
              _
            $region71: #{custom-call.13} parent=57 // pred_check_branch
              %207 = sbr.rel (0) target = $region73
            $region72: #{custom-call.13} parent=57 // pred_region
              loop: start=0, step=1, limit=1
              $region74: #{custom-call.13} parent=72 // loop_pre_header
                _
              $region75: #{custom-call.13} parent=72 // loop_header
                %s210 = sphi 0, %s214
                %p211 = scmp.ge.s32.totalorder %s210, 1
                %s215 = sphi %s183, %s183
                %s216 = sphi %s188, %s188
              $region76: #{custom-call.13} parent=72 // loop_header_branch
                %213 = sbr.rel (%p211) target = $region80
              $region77: #{custom-call.13} parent=72 // loop_body
                %v217 = vld [vmem:[%s215] sm:$0xf]
                %218 = vst [vmem:[%s216] sm:$0xf] %v217
              $region78: #{custom-call.13} parent=72 // loop_footer
                %s214 = sadd.s32 1, %s210
              $region79: #{custom-call.13} parent=72 // loop_footer_branch
                %209 = sbr.rel target = $region75
              $region80: #{custom-call.13} parent=72 // loop_exit
                _
            $region73: #{custom-call.13} parent=57 // pred_fallthru
              _
          $region58: #{custom-call.13} parent=53 // pred_fallthru
            _
          // Predicated region
          $region59: #{custom-call.13} parent=53 // pred_check
            _
          $region60: #{custom-call.13} parent=53 // pred_check_branch
            %194 = sbr.rel (0) target = $region62
          $region61: #{custom-call.13} parent=53 // pred_region
            loop: start=0, step=1, limit=1
            $region63: #{custom-call.13} parent=61 // loop_pre_header
              _
            $region64: #{custom-call.13} parent=61 // loop_header
              %s197 = sphi 0, %s201
              %p198 = scmp.ge.s32.totalorder %s197, 1
              %s202 = sphi %s183, %s183
              %s203 = sphi %s188, %s188
            $region65: #{custom-call.13} parent=61 // loop_header_branch
              %200 = sbr.rel (%p198) target = $region69
            $region66: #{custom-call.13} parent=61 // loop_body
              %v204 = vld [vmem:[%s202] sm:$0xf]
              %205 = vst [vmem:[%s203] sm:$0xf] %v204
            $region67: #{custom-call.13} parent=61 // loop_footer
              %s201 = sadd.s32 1, %s197
            $region68: #{custom-call.13} parent=61 // loop_footer_branch
              %196 = sbr.rel target = $region64
            $region69: #{custom-call.13} parent=61 // loop_exit
              _
          $region62: #{custom-call.13} parent=53 // pred_fallthru
            _
        $region54: #{custom-call.13} parent=49 // pred_fallthru
          _
        %219 = vnop
      $region50: #{custom-call.13} parent=5 // pred_fallthru
        _
      %p220 = scmp.le.s32.totalorder 2, %s3
      // Predicated region
      $region81: #{custom-call.13} parent=5 // pred_check
        %p221 = pneg %p220
      $region82: #{custom-call.13} parent=5 // pred_check_branch
        %223 = sbr.rel (%p221) target = $region84
      $region83: #{custom-call.13} parent=5 // pred_region
        %s224 = ssub.s32 %s3, 2
        %s225 = sand.u32 %s9, 1
        %s226 = sand.u32 %s9, 1
        %s227 = smul.addr %s226, 4
        %s228 = scalar_lea.vmem [#allocation3], %s227
      $region84: #{custom-call.13} parent=5 // pred_fallthru
        _
    $region6: #{custom-call.13} parent=1 // loop_footer
      %s7 = sadd.s32 1, %s3
    $region7: #{custom-call.13} parent=1 // loop_footer_branch
      %2 = sbr.rel target = $region3
    $region8: #{custom-call.13} parent=1 // loop_exit
      _

// kernel: custom-call.12
$region0: #{custom-call.12}
  %s0 = inlined_call_operand.vmem [shape: f32[2,1,4,4], index: 0, kind: input, shape index: {}]
  %s1 = inlined_call_operand.vmem [shape: f32[2,1,4,4], index: 1, kind: output, shape index: {}]
  $region1: #{custom-call.12} parent=0
    #allocation0 [shape = 'u8[4096]{0}', space=vmem, size = 0x1000, scoped, tag = 'operand span for operand 0']
    #allocation1 [shape = 'u8[4096]{0}', space=vmem, size = 0x1000, scoped, tag = 'packed  for operand 0']
    #allocation2 [shape = 'u8[4096]{0}', space=vmem, size = 0x1000, scoped, tag = 'operand span for operand 1']
    #allocation3 [shape = 'u8[4096]{0}', space=vmem, size = 0x1000, scoped, tag = 'packed  for operand 1']
    loop: start=0, step=1, limit=4
    $region2: #{custom-call.12} parent=1 // loop_pre_header
      _
    $region3: #{custom-call.12} parent=1 // loop_header
      %s3 = sphi 0, %s7
      %p4 = scmp.ge.s32.totalorder %s3, 4
      %s10 = sphi 0, %s36
      %s11 = sphi 0, %s32
      %s12 = sphi 0, %s28
      %s13 = sphi 0, %s24
      %s14 = sphi 0, %s10
      %s15 = sphi 0, %s11
      %s16 = sphi 0, %s12
      %s17 = sphi 0, %s13
      %s18 = sphi 0, %s14
      %s19 = sphi 0, %s15
      %s20 = sphi 0, %s16
      %s21 = sphi 0, %s17
    $region4: #{custom-call.12} parent=1 // loop_header_branch
      %6 = sbr.rel (%p4) target = $region8
    $region5: #{custom-call.12} parent=1 // loop_body
      %s8 = ssub.s32 %s3, 1
      %s9 = ssub.s32 %s3, 2
      %s22 = sadd.s32 1, %s13
      %p23 = scmp.ge.s32.totalorder %s22, 1
      %s24 = scalar_select %p23, 0, %s22
      %s25 = sadd.s32 1, %s12
      %s26 = scalar_select %p23, %s25, %s12
      %p27 = scmp.ge.s32.totalorder %s26, 1
      %s28 = scalar_select %p27, 0, %s26
      %s29 = sadd.s32 1, %s11
      %s30 = scalar_select %p27, %s29, %s11
      %p31 = scmp.ge.s32.totalorder %s30, 1
      %s32 = scalar_select %p31, 0, %s30
      %s33 = sadd.s32 1, %s10
      %s34 = scalar_select %p31, %s33, %s10
      %p35 = scmp.ge.s32.totalorder %s34, 2
      %s36 = scalar_select %p35, 0, %s34
      %p37 = scmp.le.s32.totalorder 1, %s3
      %p38 = scmp.lt.s32.totalorder %s3, 3
      %p39 = pnand %p37, %p38
      %p40 = pneg %p39
      // Predicated region
      $region9: #{custom-call.12} parent=5 // pred_check
        _
      $region10: #{custom-call.12} parent=5 // pred_check_branch
        %42 = sbr.rel (%p39) target = $region12
      $region11: #{custom-call.12} parent=5 // pred_region
        %s43 = ssub.s32 %s3, 1
      $region12: #{custom-call.12} parent=5 // pred_fallthru
        _
      %p44 = scmp.lt.s32.totalorder %s3, 2
      // Predicated region
      $region13: #{custom-call.12} parent=5 // pred_check
        %p45 = pneg %p44
      $region14: #{custom-call.12} parent=5 // pred_check_branch
        %47 = sbr.rel (%p45) target = $region16
      $region15: #{custom-call.12} parent=5 // pred_region
        %s48 = sand.u32 %s3, 1
        %s49 = sand.u32 %s3, 1
        %s50 = smul.addr %s49, 4
        %s51 = scalar_lea.vmem [#allocation1], %s50
        %s52 = sadd.s32 %s13, %s12
        %s53 = sadd.s32 %s52, %s11
        %s54 = sadd.s32 %s53, %s10
        %s55 = smul.addr %s54, 4
        %s56 = scalar_lea.vmem %s0, %s55
        // Predicated region
        $region17: #{custom-call.12} parent=15 // pred_check
          _
        $region18: #{custom-call.12} parent=15 // pred_check_branch
          %58 = sbr.rel (0) target = $region20
        $region19: #{custom-call.12} parent=15 // pred_region
          // Predicated region
          $region21: #{custom-call.12} parent=19 // pred_check
            _
          $region22: #{custom-call.12} parent=19 // pred_check_branch
            %60 = sbr.rel target = $region24
          $region23: #{custom-call.12} parent=19 // pred_region
            // Predicated region
            $region36: #{custom-call.12} parent=23 // pred_check
              _
            $region37: #{custom-call.12} parent=23 // pred_check_branch
              %75 = sbr.rel (0) target = $region39
            $region38: #{custom-call.12} parent=23 // pred_region
              loop: start=0, step=1, limit=1
              $region40: #{custom-call.12} parent=38 // loop_pre_header
                _
              $region41: #{custom-call.12} parent=38 // loop_header
                %s78 = sphi 0, %s82
                %p79 = scmp.ge.s32.totalorder %s78, 1
                %s83 = sphi %s56, %s56
                %s84 = sphi %s51, %s51
              $region42: #{custom-call.12} parent=38 // loop_header_branch
                %81 = sbr.rel (%p79) target = $region46
              $region43: #{custom-call.12} parent=38 // loop_body
                %v85 = vld [vmem:[%s83] sm:$0xf]
                %86 = vst [vmem:[%s84] sm:$0xf] %v85
              $region44: #{custom-call.12} parent=38 // loop_footer
                %s82 = sadd.s32 1, %s78
              $region45: #{custom-call.12} parent=38 // loop_footer_branch
                %77 = sbr.rel target = $region41
              $region46: #{custom-call.12} parent=38 // loop_exit
                _
            $region39: #{custom-call.12} parent=23 // pred_fallthru
              _
          $region24: #{custom-call.12} parent=19 // pred_fallthru
            _
          // Predicated region
          $region25: #{custom-call.12} parent=19 // pred_check
            _
          $region26: #{custom-call.12} parent=19 // pred_check_branch
            %62 = sbr.rel (0) target = $region28
          $region27: #{custom-call.12} parent=19 // pred_region
            loop: start=0, step=1, limit=1
            $region29: #{custom-call.12} parent=27 // loop_pre_header
              _
            $region30: #{custom-call.12} parent=27 // loop_header
              %s65 = sphi 0, %s69
              %p66 = scmp.ge.s32.totalorder %s65, 1
              %s70 = sphi %s56, %s56
              %s71 = sphi %s51, %s51
            $region31: #{custom-call.12} parent=27 // loop_header_branch
              %68 = sbr.rel (%p66) target = $region35
            $region32: #{custom-call.12} parent=27 // loop_body
              %v72 = vld [vmem:[%s70] sm:$0xf]
              %73 = vst [vmem:[%s71] sm:$0xf] %v72
            $region33: #{custom-call.12} parent=27 // loop_footer
              %s69 = sadd.s32 1, %s65
            $region34: #{custom-call.12} parent=27 // loop_footer_branch
              %64 = sbr.rel target = $region30
            $region35: #{custom-call.12} parent=27 // loop_exit
              _
          $region28: #{custom-call.12} parent=19 // pred_fallthru
            _
        $region20: #{custom-call.12} parent=15 // pred_fallthru
          _
        %87 = vnop
      $region16: #{custom-call.12} parent=5 // pred_fallthru
        _
      %p88 = scmp.le.s32.totalorder 1, %s3
      %p89 = scmp.lt.s32.totalorder %s3, 3
      %p90 = pnand %p88, %p89
      %p91 = pneg %p90
      // Predicated region
      $region47: #{custom-call.12} parent=5 // pred_check
        _
      $region48: #{custom-call.12} parent=5 // pred_check_branch
        %93 = sbr.rel (%p90) target = $region50
      $region49: #{custom-call.12} parent=5 // pred_region
        #allocation4 [shape = 'f32[4,4]{1,0}', space=vmem, size = 0x1000, scoped, tag = 'rescaled input a']
        %s94 = ssub.s32 %s3, 1
        %s95 = sand.u32 %s8, 1
        %s96 = sand.u32 %s8, 1
        %s97 = smul.addr %s96, 4
        %s98 = scalar_lea.vmem [#allocation1], %s97
        %s99 = sand.u32 %s8, 1
        %s100 = sand.u32 %s8, 1
        %s101 = smul.addr %s100, 4
        %s102 = scalar_lea.vmem [#allocation1], %s101
        %s103 = sand.u32 %s8, 1
        %s104 = sand.u32 %s8, 1
        %s105 = smul.addr %s104, 4
        %s106 = scalar_lea.vmem [#allocation3], %s105
        %s108 = sshllo.u32 0, 4
        %v109 = vld [vmem:[%s102] sm:%s108]
        %110 = vst [vmem:[#allocation0] sm:%s108] %v109
        %v111 = vlaneseq
        %v112 = vand.u32 %v111, 127
        %vm113 = vcmp.lt.s32.totalorder %v112, 4
        %v114 = vlaneseq
        %v115 = vshrl.u32 %v114, 7
        %vm117 = vcmp.eq.s32.totalorder %v115, %v112
        %v118 = vld [vmem:[#allocation0] sm:$0xff]
        %v119 = vsel %vm117, %v118, 0.0
        %120 = vadd.xlane.f32.xlu0 %v119
        %v121 = vpop.xlane.xlu0 %120
        %vm122 = vcmp.le.s32.totalorder %v115, %v112
        %vm123 = vmand %vm122, %vm113
        %v124 = vsel %vm123, %v118, 0.0
        %v125 = vrcp.pop %v121
        %v126 = vmul.f32 %v124, %v125
        %127 = vst [vmem:[#allocation4] sm:$0xff] %v126
        %v128 = vlaneseq
        %v129 = vand.u32 %v128, 127
        %v130 = vlaneseq
        %v131 = vshrl.u32 %v130, 7
        %vm133 = vcmp.eq.s32.totalorder %v129, %v131
        %v134 = vlaneseq
        %v135 = vand.u32 %v134, 127
        %vm136 = vcmp.eq.s32.totalorder %v135, 3
        %v137 = vsel %vm136, 1.0, -1.0
        %v138 = vsel %vm133, %v137, 0.0
        %s139 = scalar_lea.vmem [#allocation4], 2
        %v140 = vld [vmem:[%s139] ss:$0 sm:$0xff]
        %v141 = vxor.u32 %v140, 2147483648
        %v142 = vlaneseq
        %v143 = vand.u32 %v142, 127
        %vm144 = vcmp.eq.s32.totalorder %v143, 2
        %v145 = vmul.f32 %v141, %v138
        %146 = vadd.xlane.f32.xlu0 %v145
        %v147 = vpop.xlane.xlu0 %146
        %v148 = vsel %vm144, %v147, %v138
        %s149 = scalar_lea.vmem [#allocation4], 1
        %v150 = vld [vmem:[%s149] ss:$0 sm:$0xff]
        %v151 = vxor.u32 %v150, 2147483648
        %v152 = vlaneseq
        %v153 = vand.u32 %v152, 127
        %vm154 = vcmp.eq.s32.totalorder %v153, 1
        %v155 = vmul.f32 %v151, %v148
        %156 = vadd.xlane.f32.xlu0 %v155
        %v157 = vpop.xlane.xlu0 %156
        %v158 = vsel %vm154, %v157, %v148
        %v159 = vld [vmem:[#allocation4] ss:$0 sm:$0xff]
        %v160 = vxor.u32 %v159, 2147483648
        %v161 = vlaneseq
        %v162 = vand.u32 %v161, 127
        %vm163 = vcmp.eq.s32.totalorder %v162, 0
        %v164 = vmul.f32 %v160, %v158
        %165 = vadd.xlane.f32.xlu0 %v164
        %v166 = vpop.xlane.xlu0 %165
        %v167 = vsel %vm163, %v166, %v158
        %v168 = vrcp.pop %v121
        %v169 = vmul.f32 %v167, %v168
        %vm170 = vweird.f32 %v121
        %v171 = vsel %vm170, %v167, %v169
        %172 = vst [vmem:[#allocation2] sm:$0xff] %v171
        %s174 = sshllo.u32 0, 4
        %v176 = vld [vmem:[#allocation2] sm:%s174]
        %s177 = sshllo.u32 0, 4
        %178 = vst [vmem:[%s106] sm:%s177] %v176
        %s179 = sand.u32 %s8, 1
        %s180 = sand.u32 %s8, 1
        %s181 = smul.addr %s180, 4
        %s182 = scalar_lea.vmem [#allocation3], %s181
        %s183 = sadd.s32 %s17, %s16
        %s184 = sadd.s32 %s183, %s15
        %s185 = sadd.s32 %s184, %s14
        %s186 = smul.addr %s185, 4
        %s187 = scalar_lea.vmem %s1, %s186
        // Predicated region
        $region51: #{custom-call.12} parent=49 // pred_check
          _
        $region52: #{custom-call.12} parent=49 // pred_check_branch
          %189 = sbr.rel (0) target = $region54
        $region53: #{custom-call.12} parent=49 // pred_region
          // Predicated region
          $region55: #{custom-call.12} parent=53 // pred_check
            _
          $region56: #{custom-call.12} parent=53 // pred_check_branch
            %191 = sbr.rel target = $region58
          $region57: #{custom-call.12} parent=53 // pred_region
            // Predicated region
            $region70: #{custom-call.12} parent=57 // pred_check
              _
            $region71: #{custom-call.12} parent=57 // pred_check_branch
              %206 = sbr.rel (0) target = $region73
            $region72: #{custom-call.12} parent=57 // pred_region
              loop: start=0, step=1, limit=1
              $region74: #{custom-call.12} parent=72 // loop_pre_header
                _
              $region75: #{custom-call.12} parent=72 // loop_header
                %s209 = sphi 0, %s213
                %p210 = scmp.ge.s32.totalorder %s209, 1
                %s214 = sphi %s182, %s182
                %s215 = sphi %s187, %s187
              $region76: #{custom-call.12} parent=72 // loop_header_branch
                %212 = sbr.rel (%p210) target = $region80
              $region77: #{custom-call.12} parent=72 // loop_body
                %v216 = vld [vmem:[%s214] sm:$0xf]
                %217 = vst [vmem:[%s215] sm:$0xf] %v216
              $region78: #{custom-call.12} parent=72 // loop_footer
                %s213 = sadd.s32 1, %s209
              $region79: #{custom-call.12} parent=72 // loop_footer_branch
                %208 = sbr.rel target = $region75
              $region80: #{custom-call.12} parent=72 // loop_exit
                _
            $region73: #{custom-call.12} parent=57 // pred_fallthru
              _
          $region58: #{custom-call.12} parent=53 // pred_fallthru
            _
          // Predicated region
          $region59: #{custom-call.12} parent=53 // pred_check
            _
          $region60: #{custom-call.12} parent=53 // pred_check_branch
            %193 = sbr.rel (0) target = $region62
          $region61: #{custom-call.12} parent=53 // pred_region
            loop: start=0, step=1, limit=1
            $region63: #{custom-call.12} parent=61 // loop_pre_header
              _
            $region64: #{custom-call.12} parent=61 // loop_header
              %s196 = sphi 0, %s200
              %p197 = scmp.ge.s32.totalorder %s196, 1
              %s201 = sphi %s182, %s182
              %s202 = sphi %s187, %s187
            $region65: #{custom-call.12} parent=61 // loop_header_branch
              %199 = sbr.rel (%p197) target = $region69
            $region66: #{custom-call.12} parent=61 // loop_body
              %v203 = vld [vmem:[%s201] sm:$0xf]
              %204 = vst [vmem:[%s202] sm:$0xf] %v203
            $region67: #{custom-call.12} parent=61 // loop_footer
              %s200 = sadd.s32 1, %s196
            $region68: #{custom-call.12} parent=61 // loop_footer_branch
              %195 = sbr.rel target = $region64
            $region69: #{custom-call.12} parent=61 // loop_exit
              _
          $region62: #{custom-call.12} parent=53 // pred_fallthru
            _
        $region54: #{custom-call.12} parent=49 // pred_fallthru
          _
        %218 = vnop
      $region50: #{custom-call.12} parent=5 // pred_fallthru
        _
      %p219 = scmp.le.s32.totalorder 2, %s3
      // Predicated region
      $region81: #{custom-call.12} parent=5 // pred_check
        %p220 = pneg %p219
      $region82: #{custom-call.12} parent=5 // pred_check_branch
        %222 = sbr.rel (%p220) target = $region84
      $region83: #{custom-call.12} parent=5 // pred_region
        %s223 = ssub.s32 %s3, 2
        %s224 = sand.u32 %s9, 1
        %s225 = sand.u32 %s9, 1
        %s226 = smul.addr %s225, 4
        %s227 = scalar_lea.vmem [#allocation3], %s226
      $region84: #{custom-call.12} parent=5 // pred_fallthru
        _
    $region6: #{custom-call.12} parent=1 // loop_footer
      %s7 = sadd.s32 1, %s3
    $region7: #{custom-call.12} parent=1 // loop_footer_branch
      %2 = sbr.rel target = $region3
    $region8: #{custom-call.12} parent=1 // loop_exit
      _

// kernel: _lambda_.1
$region0: #{_lambda_.1}
  #allocation0 [shape = 'u32[]', space=smem, size = 0x4, offset = 0x4, fixed_abs, tag = 'smem constant byte address 0x4 - core index']
  #allocation1 [shape = 'u32[144,128]{1,0:T(1,128)}', space=vmem, size = 0x12000, scoped, tag = 'internal scratch']
  %s0 = inlined_call_operand.vmem [shape: f32[2,217], index: 0, kind: input, shape index: {}]
  %s1 = inlined_call_operand.vmem [shape: f32[24,24], index: 1, kind: input, shape index: {}]
  %s2 = inlined_call_operand.vmem [shape: bf16[217,768], index: 2, kind: input, shape index: {}]
  %s3 = inlined_call_operand.vmem [shape: f32[1,768], index: 3, kind: input, shape index: {}]
  %s4 = inlined_call_operand.vmem [shape: f32[24,256], index: 4, kind: input, shape index: {}]
  %s5 = inlined_call_operand.vmem [shape: f32[2,768], index: 5, kind: output, shape index: {0}]
  %s6 = inlined_call_operand.vmem [shape: f32[2,768], index: 6, kind: output, shape index: {1}]
  %7 = xla_tuple %s5, %s6
  %s8 = sld [smem:[#allocation0]]
  $region38: #{_lambda_.1} parent=0
    _
  %s10 = ssub.s32 1, %s8
  %s11 = scalar_select 0, %s10, %s8
  // Predicated region
  $region2: #{_lambda_.1} parent=0 // pred_check
    _
  $region3: #{_lambda_.1} parent=0 // pred_check_branch
    %13 = sbr.rel (0) target = $region5
  $region4: #{_lambda_.1} parent=0 // pred_region
    _
  $region5: #{_lambda_.1} parent=0 // pred_fallthru
    _
  // Predicated region
  $region6: #{_lambda_.1} parent=0 // pred_check
    _
  $region7: #{_lambda_.1} parent=0 // pred_check_branch
    %15 = sbr.rel (0) target = $region9
  $region8: #{_lambda_.1} parent=0 // pred_region
    _
  $region9: #{_lambda_.1} parent=0 // pred_fallthru
    _
  // Predicated region
  $region10: #{_lambda_.1} parent=0 // pred_check
    _
  $region11: #{_lambda_.1} parent=0 // pred_check_branch
    %17 = sbr.rel (0) target = $region13
  $region12: #{_lambda_.1} parent=0 // pred_region
    _
  $region13: #{_lambda_.1} parent=0 // pred_fallthru
    _
  // Predicated region
  $region14: #{_lambda_.1} parent=0 // pred_check
    _
  $region15: #{_lambda_.1} parent=0 // pred_check_branch
    %19 = sbr.rel (0) target = $region17
  $region16: #{_lambda_.1} parent=0 // pred_region
    _
  $region17: #{_lambda_.1} parent=0 // pred_fallthru
    _
  // Predicated region
  $region18: #{_lambda_.1} parent=0 // pred_check
    _
  $region19: #{_lambda_.1} parent=0 // pred_check_branch
    %21 = sbr.rel (0) target = $region21
  $region20: #{_lambda_.1} parent=0 // pred_region
    _
  $region21: #{_lambda_.1} parent=0 // pred_fallthru
    _
  %v23 = vld [vmem:[%s0] sm:$0xf]
  %v26 = vunpack.c.l.s4 1983009808
  %v27 = vunpack.c.0.s8 %v26
  %v28 = vlaneseq
  %v29 = vshrl.u32 %v28, 7
  %v30 = vsub.s32 %v27, %v29
  %v31 = vrot.slane %v23, %v30
  %v32 = vcombine.high %v31, %v31
  %v35 = vpack.c.bf16 %v31, %v31
  %v36 = vpack.c.bf16 %v32, %v32
  %v37 = vld [vmem:[%s2] sm:$0xff]
  %v38 = vld [vmem:[%s2 + $0x8] sm:$0xff]
  %v39 = vld [vmem:[%s2 + $0x10] sm:$0xff]
  %v40 = vld [vmem:[%s2 + $0x18] sm:$0xff]
  %v41 = vld [vmem:[%s2 + $0x20] sm:$0xff]
  %v42 = vld [vmem:[%s2 + $0x28] sm:$0xff]
  %v43 = vld [vmem:[%s2 + $0x30] sm:$0xff]
  %v44 = vld [vmem:[%s2 + $0x38] sm:$0xff]
  %v45 = vld [vmem:[%s2 + $0x40] sm:$0xff]
  %v46 = vld [vmem:[%s2 + $0x48] sm:$0xff]
  %v47 = vld [vmem:[%s2 + $0x50] sm:$0xff]
  %v48 = vld [vmem:[%s2 + $0x58] sm:$0xff]
  %v49 = vld [vmem:[%s2 + $0x60] sm:$0xff]
  %v50 = vld [vmem:[%s2 + $0x68] sm:$0xff]
  %v51 = vld [vmem:[%s2 + $0x70] sm:$0xff]
  %v52 = vld [vmem:[%s2 + $0x78] sm:$0xff]
  %v53 = vld [vmem:[%s2 + $0x80] sm:$0xff]
  %v54 = vld [vmem:[%s2 + $0x88] sm:$0xff]
  %v55 = vld [vmem:[%s2 + $0x90] sm:$0xff]
  %v56 = vld [vmem:[%s2 + $0x98] sm:$0xff]
  %v57 = vld [vmem:[%s2 + $0xa0] sm:$0xff]
  %v58 = vld [vmem:[%s2 + $0xa8] sm:$0xff]
  %v59 = vld [vmem:[%s2 + $0xb0] sm:$0xff]
  %v60 = vld [vmem:[%s2 + $0xb8] sm:$0xff]
  %v61 = vld [vmem:[%s2 + $0xc0] sm:$0xff]
  %v62 = vld [vmem:[%s2 + $0xc8] sm:$0xff]
  %v63 = vld [vmem:[%s2 + $0xd0] sm:$0xff]
  %v64 = vld [vmem:[%s2 + $0xd8] sm:$0xff]
  %v65 = vld [vmem:[%s2 + $0xe0] sm:$0xff]
  %v66 = vld [vmem:[%s2 + $0xe8] sm:$0xff]
  %v67 = vld [vmem:[%s2 + $0xf0] sm:$0xff]
  %v68 = vld [vmem:[%s2 + $0xf8] sm:$0xff]
  %v69 = vld [vmem:[%s2 + $0x100] sm:$0xff]
  %v70 = vld [vmem:[%s2 + $0x108] sm:$0xff]
  %v71 = vld [vmem:[%s2 + $0x110] sm:$0xff]
  %v72 = vld [vmem:[%s2 + $0x118] sm:$0xff]
  %v73 = vld [vmem:[%s2 + $0x120] sm:$0xff]
  %v74 = vld [vmem:[%s2 + $0x128] sm:$0xff]
  %v75 = vld [vmem:[%s2 + $0x130] sm:$0xff]
  %v76 = vld [vmem:[%s2 + $0x138] sm:$0xff]
  %v77 = vld [vmem:[%s2 + $0x140] sm:$0xff]
  %v78 = vld [vmem:[%s2 + $0x148] sm:$0xff]
  %v79 = vld [vmem:[%s2 + $0x150] sm:$0xff]
  %v80 = vld [vmem:[%s2 + $0x158] sm:$0xff]
  %v81 = vld [vmem:[%s2 + $0x160] sm:$0xff]
  %v82 = vld [vmem:[%s2 + $0x168] sm:$0xff]
  %v83 = vld [vmem:[%s2 + $0x170] sm:$0xff]
  %v84 = vld [vmem:[%s2 + $0x178] sm:$0xff]
  %v85 = vld [vmem:[%s2 + $0x180] sm:$0xff]
  %v86 = vld [vmem:[%s2 + $0x188] sm:$0xff]
  %v87 = vld [vmem:[%s2 + $0x190] sm:$0xff]
  %v88 = vld [vmem:[%s2 + $0x198] sm:$0xff]
  %v89 = vld [vmem:[%s2 + $0x1a0] sm:$0xff]
  %v90 = vld [vmem:[%s2 + $0x1a8] sm:$0xff]
  %v91 = vld [vmem:[%s2 + $0x1b0] sm:$0xff]
  %v92 = vld [vmem:[%s2 + $0x1b8] sm:$0xff]
  %v93 = vld [vmem:[%s2 + $0x1c0] sm:$0xff]
  %v94 = vld [vmem:[%s2 + $0x1c8] sm:$0xff]
  %v95 = vld [vmem:[%s2 + $0x1d0] sm:$0xff]
  %v96 = vld [vmem:[%s2 + $0x1d8] sm:$0xff]
  %v97 = vld [vmem:[%s2 + $0x1e0] sm:$0xff]
  %v98 = vld [vmem:[%s2 + $0x1e8] sm:$0xff]
  %v99 = vld [vmem:[%s2 + $0x1f0] sm:$0xff]
  %v100 = vld [vmem:[%s2 + $0x1f8] sm:$0xff]
  %v101 = vld [vmem:[%s2 + $0x200] sm:$0xff]
  %v102 = vld [vmem:[%s2 + $0x208] sm:$0xff]
  %v103 = vld [vmem:[%s2 + $0x210] sm:$0xff]
  %v104 = vld [vmem:[%s2 + $0x218] sm:$0xff]
  %v105 = vld [vmem:[%s2 + $0x220] sm:$0xff]
  %v106 = vld [vmem:[%s2 + $0x228] sm:$0xff]
  %v107 = vld [vmem:[%s2 + $0x230] sm:$0xff]
  %v108 = vld [vmem:[%s2 + $0x238] sm:$0xff]
  %v109 = vld [vmem:[%s2 + $0x240] sm:$0xff]
  %v110 = vld [vmem:[%s2 + $0x248] sm:$0xff]
  %v111 = vld [vmem:[%s2 + $0x250] sm:$0xff]
  %v112 = vld [vmem:[%s2 + $0x258] sm:$0xff]
  %v113 = vld [vmem:[%s2 + $0x260] sm:$0xff]
  %v114 = vld [vmem:[%s2 + $0x268] sm:$0xff]
  %v115 = vld [vmem:[%s2 + $0x270] sm:$0xff]
  %v116 = vld [vmem:[%s2 + $0x278] sm:$0xff]
  %v117 = vld [vmem:[%s2 + $0x280] sm:$0xff]
  %v118 = vld [vmem:[%s2 + $0x288] sm:$0x11]
  %v119 = vld [vmem:[%s2 + $0x290] sm:$0x11]
  %v120 = vld [vmem:[%s2 + $0x298] sm:$0x11]
  %v121 = vld [vmem:[%s3] sm:$0x3f]
  %v123 = vlaneseq
  %v124 = vshrl.u32 %v123, 7
  %v125 = vsub.s32 0, %v124
  %v126 = vrot.slane %v121, %v125
  %v127 = vlaneseq
  %v128 = vshrl.u32 %v127, 7
  %v129 = vsub.s32 1, %v128
  %v130 = vrot.slane %v121, %v129
  %v131 = vlaneseq
  %v132 = vshrl.u32 %v131, 7
  %v133 = vsub.s32 2, %v132
  %v134 = vrot.slane %v121, %v133
  %v135 = vlaneseq
  %v136 = vshrl.u32 %v135, 7
  %v137 = vsub.s32 3, %v136
  %v138 = vrot.slane %v121, %v137
  %v139 = vlaneseq
  %v140 = vshrl.u32 %v139, 7
  %v141 = vsub.s32 4, %v140
  %v142 = vrot.slane %v121, %v141
  %v143 = vlaneseq
  %v144 = vshrl.u32 %v143, 7
  %v145 = vsub.s32 5, %v144
  %v146 = vrot.slane %v121, %v145
  %v237 = vunpack.c.l.b16 %v37
  %v238 = vunpack.c.h.b16 %v37
  %v239 = vunpack.c.l.b16 %v38
  %v240 = vunpack.c.h.b16 %v38
  %v241 = vunpack.c.l.b16 %v39
  %v242 = vunpack.c.h.b16 %v39
  %v243 = vunpack.c.l.b16 %v40
  %v244 = vunpack.c.h.b16 %v40
  %v245 = vunpack.c.l.b16 %v41
  %v246 = vunpack.c.h.b16 %v41
  %v247 = vunpack.c.l.b16 %v42
  %v248 = vunpack.c.h.b16 %v42
  %v249 = vunpack.c.l.b16 %v43
  %v250 = vunpack.c.h.b16 %v43
  %v251 = vunpack.c.l.b16 %v44
  %v252 = vunpack.c.h.b16 %v44
  %v253 = vunpack.c.l.b16 %v45
  %v254 = vunpack.c.h.b16 %v45
  %v255 = vunpack.c.l.b16 %v46
  %v256 = vunpack.c.h.b16 %v46
  %v257 = vunpack.c.l.b16 %v47
  %v258 = vunpack.c.h.b16 %v47
  %v259 = vunpack.c.l.b16 %v48
  %v260 = vunpack.c.h.b16 %v48
  %v261 = vunpack.c.l.b16 %v49
  %v262 = vunpack.c.h.b16 %v49
  %v263 = vunpack.c.l.b16 %v50
  %v264 = vunpack.c.h.b16 %v50
  %v265 = vunpack.c.l.b16 %v51
  %v266 = vunpack.c.h.b16 %v51
  %v267 = vunpack.c.l.b16 %v52
  %v268 = vunpack.c.h.b16 %v52
  %v269 = vunpack.c.l.b16 %v53
  %v270 = vunpack.c.h.b16 %v53
  %v271 = vunpack.c.l.b16 %v54
  %v272 = vunpack.c.h.b16 %v54
  %v273 = vunpack.c.l.b16 %v55
  %v274 = vunpack.c.h.b16 %v55
  %v275 = vunpack.c.l.b16 %v56
  %v276 = vunpack.c.h.b16 %v56
  %v277 = vunpack.c.l.b16 %v57
  %v278 = vunpack.c.h.b16 %v57
  %v279 = vunpack.c.l.b16 %v58
  %v280 = vunpack.c.h.b16 %v58
  %v281 = vunpack.c.l.b16 %v59
  %v282 = vunpack.c.h.b16 %v59
  %v283 = vunpack.c.l.b16 %v60
  %v284 = vunpack.c.h.b16 %v60
  %v285 = vunpack.c.l.b16 %v61
  %v286 = vunpack.c.h.b16 %v61
  %v287 = vunpack.c.l.b16 %v62
  %v288 = vunpack.c.h.b16 %v62
  %v289 = vunpack.c.l.b16 %v63
  %v290 = vunpack.c.h.b16 %v63
  %v291 = vunpack.c.l.b16 %v64
  %v292 = vunpack.c.h.b16 %v64
  %v293 = vunpack.c.l.b16 %v65
  %v294 = vunpack.c.h.b16 %v65
  %v295 = vunpack.c.l.b16 %v66
  %v296 = vunpack.c.h.b16 %v66
  %v297 = vunpack.c.l.b16 %v67
  %v298 = vunpack.c.h.b16 %v67
  %v299 = vunpack.c.l.b16 %v68
  %v300 = vunpack.c.h.b16 %v68
  %v301 = vunpack.c.l.b16 %v69
  %v302 = vunpack.c.h.b16 %v69
  %v303 = vunpack.c.l.b16 %v70
  %v304 = vunpack.c.h.b16 %v70
  %v305 = vunpack.c.l.b16 %v71
  %v306 = vunpack.c.h.b16 %v71
  %v307 = vunpack.c.l.b16 %v72
  %v308 = vunpack.c.h.b16 %v72
  %v309 = vunpack.c.l.b16 %v73
  %v310 = vunpack.c.h.b16 %v73
  %v311 = vunpack.c.l.b16 %v74
  %v312 = vunpack.c.h.b16 %v74
  %v313 = vunpack.c.l.b16 %v75
  %v314 = vunpack.c.h.b16 %v75
  %v315 = vunpack.c.l.b16 %v76
  %v316 = vunpack.c.h.b16 %v76
  %v317 = vunpack.c.l.b16 %v77
  %v318 = vunpack.c.h.b16 %v77
  %v319 = vunpack.c.l.b16 %v78
  %v320 = vunpack.c.h.b16 %v78
  %v321 = vunpack.c.l.b16 %v79
  %v322 = vunpack.c.h.b16 %v79
  %v323 = vunpack.c.l.b16 %v80
  %v324 = vunpack.c.h.b16 %v80
  %v325 = vunpack.c.l.b16 %v81
  %v326 = vunpack.c.h.b16 %v81
  %v327 = vunpack.c.l.b16 %v82
  %v328 = vunpack.c.h.b16 %v82
  %v329 = vunpack.c.l.b16 %v83
  %v330 = vunpack.c.h.b16 %v83
  %v331 = vunpack.c.l.b16 %v84
  %v332 = vunpack.c.h.b16 %v84
  %v333 = vunpack.c.l.b16 %v85
  %v334 = vunpack.c.h.b16 %v85
  %v335 = vunpack.c.l.b16 %v86
  %v336 = vunpack.c.h.b16 %v86
  %v337 = vunpack.c.l.b16 %v87
  %v338 = vunpack.c.h.b16 %v87
  %v339 = vunpack.c.l.b16 %v88
  %v340 = vunpack.c.h.b16 %v88
  %v341 = vunpack.c.l.b16 %v89
  %v342 = vunpack.c.h.b16 %v89
  %v343 = vunpack.c.l.b16 %v90
  %v344 = vunpack.c.h.b16 %v90
  %v345 = vunpack.c.l.b16 %v91
  %v346 = vunpack.c.h.b16 %v91
  %v347 = vunpack.c.l.b16 %v92
  %v348 = vunpack.c.h.b16 %v92
  %v349 = vunpack.c.l.b16 %v93
  %v350 = vunpack.c.h.b16 %v93
  %v351 = vunpack.c.l.b16 %v94
  %v352 = vunpack.c.h.b16 %v94
  %v353 = vunpack.c.l.b16 %v95
  %v354 = vunpack.c.h.b16 %v95
  %v355 = vunpack.c.l.b16 %v96
  %v356 = vunpack.c.h.b16 %v96
  %v357 = vunpack.c.l.b16 %v97
  %v358 = vunpack.c.h.b16 %v97
  %v359 = vunpack.c.l.b16 %v98
  %v360 = vunpack.c.h.b16 %v98
  %v361 = vunpack.c.l.b16 %v99
  %v362 = vunpack.c.h.b16 %v99
  %v363 = vunpack.c.l.b16 %v100
  %v364 = vunpack.c.h.b16 %v100
  %v365 = vunpack.c.l.b16 %v101
  %v366 = vunpack.c.h.b16 %v101
  %v367 = vunpack.c.l.b16 %v102
  %v368 = vunpack.c.h.b16 %v102
  %v369 = vunpack.c.l.b16 %v103
  %v370 = vunpack.c.h.b16 %v103
  %v371 = vunpack.c.l.b16 %v104
  %v372 = vunpack.c.h.b16 %v104
  %v373 = vunpack.c.l.b16 %v105
  %v374 = vunpack.c.h.b16 %v105
  %v375 = vunpack.c.l.b16 %v106
  %v376 = vunpack.c.h.b16 %v106
  %v377 = vunpack.c.l.b16 %v107
  %v378 = vunpack.c.h.b16 %v107
  %v379 = vunpack.c.l.b16 %v108
  %v380 = vunpack.c.h.b16 %v108
  %v381 = vunpack.c.l.b16 %v109
  %v382 = vunpack.c.h.b16 %v109
  %v383 = vunpack.c.l.b16 %v110
  %v384 = vunpack.c.h.b16 %v110
  %v385 = vunpack.c.l.b16 %v111
  %v386 = vunpack.c.h.b16 %v111
  %v387 = vunpack.c.l.b16 %v112
  %v388 = vunpack.c.h.b16 %v112
  %v389 = vunpack.c.l.b16 %v113
  %v390 = vunpack.c.h.b16 %v113
  %v391 = vunpack.c.l.b16 %v114
  %v392 = vunpack.c.h.b16 %v114
  %v393 = vunpack.c.l.b16 %v115
  %v394 = vunpack.c.h.b16 %v115
  %v395 = vunpack.c.l.b16 %v116
  %v396 = vunpack.c.h.b16 %v116
  %v397 = vunpack.c.l.b16 %v117
  %v398 = vunpack.c.h.b16 %v117
  %v399 = vunpack.c.l.b16 %v118
  %v400 = vunpack.c.h.b16 %v118
  %v401 = vunpack.c.l.b16 %v119
  %v402 = vunpack.c.h.b16 %v119
  %v403 = vunpack.c.l.b16 %v120
  %v404 = vunpack.c.h.b16 %v120
  %v405 = vpack.c.b16 %v243, %v237
  %v406 = vpack.c.b16 %v244, %v238
  %v407 = vpack.c.b16 %v245, %v239
  %v408 = vpack.c.b16 %v246, %v240
  %v409 = vpack.c.b16 %v247, %v241
  %v410 = vpack.c.b16 %v248, %v242
  %v411 = vpack.c.b16 %v255, %v249
  %v412 = vpack.c.b16 %v256, %v250
  %v413 = vpack.c.b16 %v257, %v251
  %v414 = vpack.c.b16 %v258, %v252
  %v415 = vpack.c.b16 %v259, %v253
  %v416 = vpack.c.b16 %v260, %v254
  %v417 = vpack.c.b16 %v267, %v261
  %v418 = vpack.c.b16 %v268, %v262
  %v419 = vpack.c.b16 %v269, %v263
  %v420 = vpack.c.b16 %v270, %v264
  %v421 = vpack.c.b16 %v271, %v265
  %v422 = vpack.c.b16 %v272, %v266
  %v423 = vpack.c.b16 %v279, %v273
  %v424 = vpack.c.b16 %v280, %v274
  %v425 = vpack.c.b16 %v281, %v275
  %v426 = vpack.c.b16 %v282, %v276
  %v427 = vpack.c.b16 %v283, %v277
  %v428 = vpack.c.b16 %v284, %v278
  %v429 = vpack.c.b16 %v291, %v285
  %v430 = vpack.c.b16 %v292, %v286
  %v431 = vpack.c.b16 %v293, %v287
  %v432 = vpack.c.b16 %v294, %v288
  %v433 = vpack.c.b16 %v295, %v289
  %v434 = vpack.c.b16 %v296, %v290
  %v435 = vpack.c.b16 %v303, %v297
  %v436 = vpack.c.b16 %v304, %v298
  %v437 = vpack.c.b16 %v305, %v299
  %v438 = vpack.c.b16 %v306, %v300
  %v439 = vpack.c.b16 %v307, %v301
  %v440 = vpack.c.b16 %v308, %v302
  %v441 = vpack.c.b16 %v315, %v309
  %v442 = vpack.c.b16 %v316, %v310
  %v443 = vpack.c.b16 %v317, %v311
  %v444 = vpack.c.b16 %v318, %v312
  %v445 = vpack.c.b16 %v319, %v313
  %v446 = vpack.c.b16 %v320, %v314
  %v447 = vpack.c.b16 %v327, %v321
  %v448 = vpack.c.b16 %v328, %v322
  %v449 = vpack.c.b16 %v329, %v323
  %v450 = vpack.c.b16 %v330, %v324
  %v451 = vpack.c.b16 %v331, %v325
  %v452 = vpack.c.b16 %v332, %v326
  %v453 = vpack.c.b16 %v339, %v333
  %v454 = vpack.c.b16 %v340, %v334
  %v455 = vpack.c.b16 %v341, %v335
  %v456 = vpack.c.b16 %v342, %v336
  %v457 = vpack.c.b16 %v343, %v337
  %v458 = vpack.c.b16 %v344, %v338
  %v459 = vpack.c.b16 %v351, %v345
  %v460 = vpack.c.b16 %v352, %v346
  %v461 = vpack.c.b16 %v353, %v347
  %v462 = vpack.c.b16 %v354, %v348
  %v463 = vpack.c.b16 %v355, %v349
  %v464 = vpack.c.b16 %v356, %v350
  %v465 = vpack.c.b16 %v363, %v357
  %v466 = vpack.c.b16 %v364, %v358
  %v467 = vpack.c.b16 %v365, %v359
  %v468 = vpack.c.b16 %v366, %v360
  %v469 = vpack.c.b16 %v367, %v361
  %v470 = vpack.c.b16 %v368, %v362
  %v471 = vpack.c.b16 %v375, %v369
  %v472 = vpack.c.b16 %v376, %v370
  %v473 = vpack.c.b16 %v377, %v371
  %v474 = vpack.c.b16 %v378, %v372
  %v475 = vpack.c.b16 %v379, %v373
  %v476 = vpack.c.b16 %v380, %v374
  %v477 = vpack.c.b16 %v387, %v381
  %v478 = vpack.c.b16 %v388, %v382
  %v479 = vpack.c.b16 %v389, %v383
  %v480 = vpack.c.b16 %v390, %v384
  %v481 = vpack.c.b16 %v391, %v385
  %v482 = vpack.c.b16 %v392, %v386
  %v483 = vpack.c.b16 %v399, %v393
  %v484 = vpack.c.b16 %v400, %v394
  %v485 = vpack.c.b16 %v401, %v395
  %v486 = vpack.c.b16 %v402, %v396
  %v487 = vpack.c.b16 %v403, %v397
  %v488 = vpack.c.b16 %v404, %v398
  %vm567 = vcmask 728064
  %v569 = vsel %vm567, %v36, 0
  %vm571 = vcmask 1043456
  %vm572 = vcmask 1044480
  %v573 = vsel %vm571, 4294967295, 65535
  %v574 = vsel %vm572, %v573, 0
  %v576 = vand.u32 %v483, %v574
  %v579 = vand.u32 %v484, %v574
  %v582 = vand.u32 %v485, %v574
  %v585 = vand.u32 %v486, %v574
  %v588 = vand.u32 %v487, %v574
  %v591 = vand.u32 %v488, %v574
  %593 = vmatprep.subr.bf16.mxu0 %v406
  %594 = vmatpush1.bf16.msra.mxu0 %v405
  %595 = vmatprep.subr.bf16.mxu0 %v412
  %596 = vmatpush1.bf16.msra.mxu0 %v411
  %597 = vmatprep.subr.bf16.mxu0 %v418
  %598 = vmatpush1.bf16.msra.mxu0 %v417
  %599 = vmatprep.subr.bf16.mxu0 %v424
  %600 = vmatpush1.bf16.msra.mxu0 %v423
  %601 = vmatprep.subr.bf16.mxu0 %v430
  %602 = vmatpush1.bf16.msra.mxu0 %v429
  %603 = vmatprep.subr.bf16.mxu0 %v436
  %604 = vmatpush1.bf16.msra.mxu0 %v435
  %605 = vmatprep.subr.bf16.mxu0 %v442
  %606 = vmatpush1.bf16.msra.mxu0 %v441
  %607 = vmatprep.subr.bf16.mxu0 %v448
  %608 = vmatpush1.bf16.msra.mxu0 %v447
  %609 = vmatprep.subr.bf16.mxu0 %v454
  %610 = vmatpush1.bf16.msra.mxu0 %v453
  %611 = vmatprep.subr.bf16.mxu0 %v460
  %612 = vmatpush1.bf16.msra.mxu0 %v459
  %613 = vmatprep.subr.bf16.mxu0 %v466
  %614 = vmatpush1.bf16.msra.mxu0 %v465
  %615 = vmatprep.subr.bf16.mxu0 %v472
  %616 = vmatpush1.bf16.msra.mxu0 %v471
  %617 = vmatprep.subr.bf16.mxu0 %v478
  %618 = vmatpush1.bf16.msra.mxu0 %v477
  %619 = vmatprep.subr.bf16.mxu0 %v579
  %620 = vmatpush1.bf16.msra.mxu0 %v576
  %621 = vmatprep.subr.bf16.mxu0 0
  %622 = vmatpush1.bf16.msra.mxu0 0
  %623 = vmatprep.subr.bf16.mxu0 0
  %624 = vmatpush1.bf16.msra.mxu0 0
  %625 = vmatprep.mubr.bf16.mxu0 %v569
  %626 = vmatmul.mubr.bf16.gmra.mrb[0].mxu0 %v35
  %v627 = vpop.f32.mrb[0].mxu0
  %v628 = vadd.f32 %v126, %v627
  %v629 = vpop.f32.mrb[0].mxu0
  %v630 = vadd.f32 %v130, %v629
  %v631 = vpop.f32.mrb[0].mxu0
  %v632 = vpop.f32.mrb[0].mxu0
  %633 = vdwg.mxu0
  %634 = vmatprep.subr.bf16.mxu0 %v408
  %635 = vmatpush1.bf16.msra.mxu0 %v407
  %636 = vmatprep.subr.bf16.mxu0 %v414
  %637 = vmatpush1.bf16.msra.mxu0 %v413
  %638 = vmatprep.subr.bf16.mxu0 %v420
  %639 = vmatpush1.bf16.msra.mxu0 %v419
  %640 = vmatprep.subr.bf16.mxu0 %v426
  %641 = vmatpush1.bf16.msra.mxu0 %v425
  %642 = vmatprep.subr.bf16.mxu0 %v432
  %643 = vmatpush1.bf16.msra.mxu0 %v431
  %644 = vmatprep.subr.bf16.mxu0 %v438
  %645 = vmatpush1.bf16.msra.mxu0 %v437
  %646 = vmatprep.subr.bf16.mxu0 %v444
  %647 = vmatpush1.bf16.msra.mxu0 %v443
  %648 = vmatprep.subr.bf16.mxu0 %v450
  %649 = vmatpush1.bf16.msra.mxu0 %v449
  %650 = vmatprep.subr.bf16.mxu0 %v456
  %651 = vmatpush1.bf16.msra.mxu0 %v455
  %652 = vmatprep.subr.bf16.mxu0 %v462
  %653 = vmatpush1.bf16.msra.mxu0 %v461
  %654 = vmatprep.subr.bf16.mxu0 %v468
  %655 = vmatpush1.bf16.msra.mxu0 %v467
  %656 = vmatprep.subr.bf16.mxu0 %v474
  %657 = vmatpush1.bf16.msra.mxu0 %v473
  %658 = vmatprep.subr.bf16.mxu0 %v480
  %659 = vmatpush1.bf16.msra.mxu0 %v479
  %660 = vmatprep.subr.bf16.mxu0 %v585
  %661 = vmatpush1.bf16.msra.mxu0 %v582
  %662 = vmatprep.subr.bf16.mxu0 0
  %663 = vmatpush1.bf16.msra.mxu0 0
  %664 = vmatprep.subr.bf16.mxu0 0
  %665 = vmatpush1.bf16.msra.mxu0 0
  %666 = vmatprep.mubr.bf16.mxu0 %v569
  %667 = vmatmul.mubr.bf16.gmra.mrb[0].mxu0 %v35
  %v668 = vpop.f32.mrb[0].mxu0
  %v669 = vadd.f32 %v134, %v668
  %v670 = vpop.f32.mrb[0].mxu0
  %v671 = vadd.f32 %v138, %v670
  %v672 = vpop.f32.mrb[0].mxu0
  %v673 = vpop.f32.mrb[0].mxu0
  %674 = vdwg.mxu0
  %675 = vmatprep.subr.bf16.mxu0 %v410
  %676 = vmatpush1.bf16.msra.mxu0 %v409
  %677 = vmatprep.subr.bf16.mxu0 %v416
  %678 = vmatpush1.bf16.msra.mxu0 %v415
  %679 = vmatprep.subr.bf16.mxu0 %v422
  %680 = vmatpush1.bf16.msra.mxu0 %v421
  %681 = vmatprep.subr.bf16.mxu0 %v428
  %682 = vmatpush1.bf16.msra.mxu0 %v427
  %683 = vmatprep.subr.bf16.mxu0 %v434
  %684 = vmatpush1.bf16.msra.mxu0 %v433
  %685 = vmatprep.subr.bf16.mxu0 %v440
  %686 = vmatpush1.bf16.msra.mxu0 %v439
  %687 = vmatprep.subr.bf16.mxu0 %v446
  %688 = vmatpush1.bf16.msra.mxu0 %v445
  %689 = vmatprep.subr.bf16.mxu0 %v452
  %690 = vmatpush1.bf16.msra.mxu0 %v451
  %691 = vmatprep.subr.bf16.mxu0 %v458
  %692 = vmatpush1.bf16.msra.mxu0 %v457
  %693 = vmatprep.subr.bf16.mxu0 %v464
  %694 = vmatpush1.bf16.msra.mxu0 %v463
  %695 = vmatprep.subr.bf16.mxu0 %v470
  %696 = vmatpush1.bf16.msra.mxu0 %v469
  %697 = vmatprep.subr.bf16.mxu0 %v476
  %698 = vmatpush1.bf16.msra.mxu0 %v475
  %699 = vmatprep.subr.bf16.mxu0 %v482
  %700 = vmatpush1.bf16.msra.mxu0 %v481
  %701 = vmatprep.subr.bf16.mxu0 %v591
  %702 = vmatpush1.bf16.msra.mxu0 %v588
  %703 = vmatprep.subr.bf16.mxu0 0
  %704 = vmatpush1.bf16.msra.mxu0 0
  %705 = vmatprep.subr.bf16.mxu0 0
  %706 = vmatpush1.bf16.msra.mxu0 0
  %707 = vmatprep.mubr.bf16.mxu0 %v569
  %708 = vmatmul.mubr.bf16.gmra.mrb[0].mxu0 %v35
  %v709 = vpop.f32.mrb[0].mxu0
  %v710 = vadd.f32 %v142, %v709
  %v711 = vpop.f32.mrb[0].mxu0
  %v712 = vadd.f32 %v146, %v711
  %v713 = vpop.f32.mrb[0].mxu0
  %v714 = vpop.f32.mrb[0].mxu0
  %715 = vdwg.mxu0
  %v722 = vcombine.low %v628, %v630
  %v723 = vcombine.low %v669, %v671
  %v725 = vunpack.c.l.s4 1983009808
  %v726 = vunpack.c.0.s8 %v725
  %v727 = vlaneseq
  %v728 = vshrl.u32 %v727, 7
  %v729 = vsub.s32 %v726, %v728
  %v730 = vrot.slane %v722, %v729
  %v732 = vunpack.c.l.s4 1983009808
  %v733 = vunpack.c.0.s8 %v732
  %v734 = vlaneseq
  %v735 = vshrl.u32 %v734, 7
  %v736 = vsub.s32 %v733, %v735
  %v737 = vrot.slane %v723, %v736
  %v738 = vcombine.low %v730, %v737
  %v739 = vcombine.low %v710, %v712
  %v741 = vunpack.c.l.s4 1983009808
  %v742 = vunpack.c.0.s8 %v741
  %v743 = vlaneseq
  %v744 = vshrl.u32 %v743, 7
  %v745 = vsub.s32 %v742, %v744
  %v746 = vrot.slane %v739, %v745
  %749 = vst [vmem:[%s5] sm:$0xff] %v738
  %750 = vst [vmem:[%s5 + $0x8] sm:$0xf] %v746
  %v751 = vld [vmem:[%s1] sm:$0xff]
  %v752 = vld [vmem:[%s1 + $0x8] sm:$0xff]
  %v753 = vld [vmem:[%s1 + $0x10] sm:$0xff]
  %v754 = vld [vmem:[%s4] sm:$0xff]
  %v755 = vld [vmem:[%s4 + $0x8] sm:$0xff]
  %v756 = vld [vmem:[%s4 + $0x10] sm:$0xff]
  %v757 = vld [vmem:[%s4 + $0x18] sm:$0xff]
  %v758 = vld [vmem:[%s4 + $0x20] sm:$0xff]
  %v759 = vld [vmem:[%s4 + $0x28] sm:$0xff]
  %vm760 = vcmask 195584
  %v762 = vsel %vm760, %v751, 0
  %v765 = vsel %vm760, %v752, 0
  %v768 = vsel %vm760, %v753, 0
  %770 = vmatprep.subr.mxu0 %v755
  %771 = vmatpush1.msra.mxu0 %v754
  %772 = vmatprep.subr.mxu0 %v757
  %773 = vmatpush1.msra.mxu0 %v756
  %774 = vmatprep.subr.mxu0 %v759
  %775 = vmatpush1.msra.mxu0 %v758
  %776 = vmatprep.subr.mxu0 0.0
  %777 = vmatpush1.msra.mxu0 0.0
  %778 = vmatprep.subr.mxu0 0.0
  %779 = vmatpush1.msra.mxu0 0.0
  %780 = vmatprep.subr.mxu0 0.0
  %781 = vmatpush1.msra.mxu0 0.0
  %782 = vmatprep.subr.mxu0 0.0
  %783 = vmatpush1.msra.mxu0 0.0
  %784 = vmatprep.subr.mxu0 0.0
  %785 = vmatpush1.msra.mxu0 0.0
  %786 = vmatprep.subr.mxu0 0.0
  %787 = vmatpush1.msra.mxu0 0.0
  %788 = vmatprep.subr.mxu0 0.0
  %789 = vmatpush1.msra.mxu0 0.0
  %790 = vmatprep.subr.mxu0 0.0
  %791 = vmatpush1.msra.mxu0 0.0
  %792 = vmatprep.subr.mxu0 0.0
  %793 = vmatpush1.msra.mxu0 0.0
  %794 = vmatprep.subr.mxu0 0.0
  %795 = vmatpush1.msra.mxu0 0.0
  %796 = vmatprep.subr.mxu0 0.0
  %797 = vmatpush1.msra.mxu0 0.0
  %798 = vmatprep.subr.mxu0 0.0
  %799 = vmatpush1.msra.mxu0 0.0
  %800 = vmatprep.subr.mxu0 0.0
  %801 = vmatpush1.msra.mxu0 0.0
  %802 = vmatprep.subr.mxu0 0.0
  %803 = vmatpush1.msra.mxu0 0.0
  %804 = vmatprep.subr.mxu0 0.0
  %805 = vmatpush1.msra.mxu0 0.0
  %806 = vmatprep.subr.mxu0 0.0
  %807 = vmatpush1.msra.mxu0 0.0
  %808 = vmatprep.subr.mxu0 0.0
  %809 = vmatpush1.msra.mxu0 0.0
  %810 = vmatprep.subr.mxu0 0.0
  %811 = vmatpush1.msra.mxu0 0.0
  %812 = vmatprep.subr.mxu0 0.0
  %813 = vmatpush1.msra.mxu0 0.0
  %814 = vmatprep.subr.mxu0 0.0
  %815 = vmatpush1.msra.mxu0 0.0
  %816 = vmatprep.subr.mxu0 0.0
  %817 = vmatpush1.msra.mxu0 0.0
  %818 = vmatprep.subr.mxu0 0.0
  %819 = vmatpush1.msra.mxu0 0.0
  %820 = vmatprep.subr.mxu0 0.0
  %821 = vmatpush1.msra.mxu0 0.0
  %822 = vmatprep.subr.mxu0 0.0
  %823 = vmatpush1.msra.mxu0 0.0
  %824 = vmatprep.subr.mxu0 0.0
  %825 = vmatpush1.msra.mxu0 0.0
  %826 = vmatprep.subr.mxu0 0.0
  %827 = vmatpush1.msra.mxu0 0.0
  %828 = vmatprep.subr.mxu0 0.0
  %829 = vmatpush1.msra.mxu0 0.0
  %830 = vmatprep.subr.mxu0 0.0
  %831 = vmatpush1.msra.mxu0 0.0
  %832 = vmatprep.subr.mxu0 0.0
  %833 = vmatpush1.msra.mxu0 0.0
  %834 = vmatprep.mubr.f32.mxu0 0.0
  %835 = vmatmul.mubr.f32.gmra.mrb[0].mxu0 %v762
  %v836 = vpop.f32.mrb[0].mxu0
  %v837 = vadd.f32 0.0, %v836
  %v838 = vpop.f32.mrb[0].mxu0
  %v839 = vadd.f32 0.0, %v838
  %840 = vmatprep.mubr.f32.mxu0 0.0
  %841 = vmatmul.mubr.f32.gmra.mrb[0].mxu0 %v765
  %v842 = vpop.f32.mrb[0].mxu0
  %v843 = vadd.f32 0.0, %v842
  %v844 = vpop.f32.mrb[0].mxu0
  %v845 = vadd.f32 0.0, %v844
  %846 = vmatprep.mubr.f32.mxu0 0.0
  %847 = vmatmul.mubr.f32.gmra.mrb[0].mxu0 %v768
  %v848 = vpop.f32.mrb[0].mxu0
  %v849 = vadd.f32 0.0, %v848
  %v850 = vpop.f32.mrb[0].mxu0
  %v851 = vadd.f32 0.0, %v850
  %852 = vdwg.mxu0
  %v853 = vmul.f32 %v837, %v628
  %v854 = vmul.f32 %v839, %v630
  %v857 = vrot.slane %v853, 2
  %v858 = vrot.slane %v854, 2
  %v861 = vadd.f32 %v837, %v857
  %v862 = vadd.f32 %v839, %v858
  %v863 = vrot.slane %v669, 6
  %v864 = vrot.slane %v671, 6
  %v867 = vmul.f32 %v837, %v863
  %v868 = vmul.f32 %v839, %v864
  %v871 = vrot.slane %v867, 4
  %v872 = vrot.slane %v868, 4
  %v875 = vadd.f32 %v861, %v871
  %v876 = vadd.f32 %v862, %v872
  %v877 = vrot.slane %v710, 4
  %v878 = vrot.slane %v712, 4
  %v881 = vmul.f32 %v837, %v877
  %v882 = vmul.f32 %v839, %v878
  %v885 = vrot.slane %v881, 6
  %v886 = vrot.slane %v882, 6
  %v889 = vadd.f32 %v875, %v885
  %v890 = vadd.f32 %v876, %v886
  %v893 = vcombine.high %v889, %v890
  %v895 = vunpack.c.l.s4 1983009808
  %v896 = vunpack.c.0.s8 %v895
  %v897 = vlaneseq
  %v898 = vshrl.u32 %v897, 7
  %v899 = vsub.s32 %v896, %v898
  %v900 = vrot.slane %v893, %v899
  %v901 = vcombine.high %v900, %v900
  %903 = vst [vmem:[%s6] sm:$0xf] %v901
  %v904 = vmul.f32 %v843, %v628
  %v905 = vmul.f32 %v845, %v630
  %v908 = vrot.slane %v904, 2
  %v909 = vrot.slane %v905, 2
  %v912 = vadd.f32 %v843, %v908
  %v913 = vadd.f32 %v845, %v909
  %v914 = vmul.f32 %v843, %v863
  %v915 = vmul.f32 %v845, %v864
  %v918 = vrot.slane %v914, 4
  %v919 = vrot.slane %v915, 4
  %v922 = vadd.f32 %v912, %v918
  %v923 = vadd.f32 %v913, %v919
  %v924 = vmul.f32 %v843, %v877
  %v925 = vmul.f32 %v845, %v878
  %v928 = vrot.slane %v924, 6
  %v929 = vrot.slane %v925, 6
  %v932 = vadd.f32 %v922, %v928
  %v933 = vadd.f32 %v923, %v929
  %v936 = vcombine.high %v932, %v933
  %v938 = vunpack.c.l.s4 1983009808
  %v939 = vunpack.c.0.s8 %v938
  %v940 = vlaneseq
  %v941 = vshrl.u32 %v940, 7
  %v942 = vsub.s32 %v939, %v941
  %v943 = vrot.slane %v936, %v942
  %v944 = vcombine.high %v943, %v943
  %946 = vst [vmem:[%s6 + $0x4] sm:$0xf] %v944
  %v947 = vmul.f32 %v849, %v628
  %v948 = vmul.f32 %v851, %v630
  %v951 = vrot.slane %v947, 2
  %v952 = vrot.slane %v948, 2
  %v955 = vadd.f32 %v849, %v951
  %v956 = vadd.f32 %v851, %v952
  %v957 = vmul.f32 %v849, %v863
  %v958 = vmul.f32 %v851, %v864
  %v961 = vrot.slane %v957, 4
  %v962 = vrot.slane %v958, 4
  %v965 = vadd.f32 %v955, %v961
  %v966 = vadd.f32 %v956, %v962
  %v967 = vmul.f32 %v849, %v877
  %v968 = vmul.f32 %v851, %v878
  %v971 = vrot.slane %v967, 6
  %v972 = vrot.slane %v968, 6
  %v975 = vadd.f32 %v965, %v971
  %v976 = vadd.f32 %v966, %v972
  %v979 = vcombine.high %v975, %v976
  %v981 = vunpack.c.l.s4 1983009808
  %v982 = vunpack.c.0.s8 %v981
  %v983 = vlaneseq
  %v984 = vshrl.u32 %v983, 7
  %v985 = vsub.s32 %v982, %v984
  %v986 = vrot.slane %v979, %v985
  %v987 = vcombine.high %v986, %v986
  %989 = vst [vmem:[%s6 + $0x8] sm:$0xf] %v987
  // Predicated region
  $region22: #{_lambda_.1} parent=0 // pred_check
    _
  $region23: #{_lambda_.1} parent=0 // pred_check_branch
    %991 = sbr.rel (0) target = $region25
  $region24: #{_lambda_.1} parent=0 // pred_region
    _
  $region25: #{_lambda_.1} parent=0 // pred_fallthru
    _
  // Predicated region
  $region26: #{_lambda_.1} parent=0 // pred_check
    _
  $region27: #{_lambda_.1} parent=0 // pred_check_branch
    %993 = sbr.rel (0) target = $region29
  $region28: #{_lambda_.1} parent=0 // pred_region
    _
  $region29: #{_lambda_.1} parent=0 // pred_fallthru
    _
  // Predicated region
  $region30: #{_lambda_.1} parent=0 // pred_check
    _
  $region31: #{_lambda_.1} parent=0 // pred_check_branch
    %995 = sbr.rel (0) target = $region33
  $region32: #{_lambda_.1} parent=0 // pred_region
    _
  $region33: #{_lambda_.1} parent=0 // pred_fallthru
    _
  // Predicated region
  $region34: #{_lambda_.1} parent=0 // pred_check
    _
  $region35: #{_lambda_.1} parent=0 // pred_check_branch
    %997 = sbr.rel (0) target = $region37
  $region36: #{_lambda_.1} parent=0 // pred_region
    _
  $region37: #{_lambda_.1} parent=0 // pred_fallthru
    _

</llo_original>
